<compile_context>
chip_gen: v7x
topology: tpu7x:2x2x1
jax: 0.10.0
libtpu: 0.0.40
codegen_flags: <defaults>
</compile_context>

<pallas_src>
import math
import functools

import jax
import jax.numpy as jnp
from jax.experimental import pallas as pl
from jax.experimental.pallas import tpu as pltpu


def _softmax_lastdim(s):
    """Row softmax of an f32 (C, C) score block; denominator on the EUP."""
    m = jnp.max(s, axis=-1, keepdims=True)
    e = jnp.exp(s - m)
    return e * pl.reciprocal(jnp.sum(e, axis=-1, keepdims=True), approx=True)


# ---------------------------------------------------------------------------
# Pallas kernel: bb batch elements per grid step, activations are (C, L=bb*Tu).
# ---------------------------------------------------------------------------
def _cla_kernel(up_ref, de_ref, do_ref, dm1_ref,
                phi_w_ref, phi_b_ref,
                w0_ref, w1_ref, w2_ref, psi_bf_ref, psi_b0_ref,
                vk_w_ref, vk_b_ref,
                q_w_ref, q_b_ref,
                up_out_ref, de_out_ref, do_out_ref,
                *, bb, t_up, c_out):
    f32 = jnp.float32
    cdt = up_ref.dtype                      # compute (MXU) dtype, e.g. bf16
    out_dt = up_out_ref.dtype
    L = bb * t_up

    up_c = up_ref[...]                      # (C, L)
    de_c = de_ref[...]                      # down[:, 2t]
    do_c = do_ref[...]                      # down[:, 2t+1]
    dm1_c = dm1_ref[...]                    # down[:, 2t-1]  (0 at t==0)

    # validity of the left (2t-1) tap: padding at t == 0 of every batch element
    pos = jax.lax.broadcasted_iota(jnp.int32, (1, L), 1)
    valid_b = (pos % t_up) != 0             # (1, L) bool

    # ---- up_plus = up + phi(up), cast once -------------------------------
    up_plus_c = (up_c.astype(f32)
                 + jnp.dot(phi_w_ref[...], up_c, preferred_element_type=f32)
                 + phi_b_ref[...]).astype(cdt)

    # k/v of up2down == repeat of k/v of up_plus (1x1 conv commutes with the
    # nearest-neighbor repeat); single stacked vk matmul, rows sliced at C.
    vk_up = (jnp.dot(vk_w_ref[...], up_plus_c, preferred_element_type=f32)
             + vk_b_ref[...])
    v_up_c = vk_up[:c_out].astype(cdt)
    k_up_c = vk_up[c_out:].astype(cdt)

    # ---- down2up = maxpool_{k3,s2,p1}(down) + psi2(psi1(down)) ------------
    de_f = de_c.astype(f32)
    do_f = do_c.astype(f32)
    mp = jnp.maximum(jnp.maximum(de_f, do_f),
                     jnp.where(valid_b, dm1_c.astype(f32), -jnp.inf))
    dsum_c = (de_f + do_f).astype(cdt)      # for the pooled q_d

    # psi_2(psi_1(.)) folded in the wrapper into W_j = psi2_w[j] @ psi1_w;
    # the tap-0 activation is already zeroed at t==0, so only mask its bias.
    psi = (jnp.dot(w0_ref[...], dm1_c, preferred_element_type=f32)
           + jnp.dot(w1_ref[...], de_c, preferred_element_type=f32)
           + jnp.dot(w2_ref[...], do_c, preferred_element_type=f32)
           + psi_bf_ref[...]
           + psi_b0_ref[...] * valid_b.astype(f32))
    down2up_c = (mp + psi).astype(cdt)

    vk_d2u = (jnp.dot(vk_w_ref[...], down2up_c, preferred_element_type=f32)
              + vk_b_ref[...])
    v_d2u_c = vk_d2u[:c_out].astype(cdt)
    k_d2u_c = vk_d2u[c_out:].astype(cdt)

    # ---- q projections (1/sqrt(C) folded into q_w / q_b), cast once -------
    q_w = q_w_ref[...]
    q_b = q_b_ref[...]
    q_u_c = (jnp.dot(q_w, up_c, preferred_element_type=f32) + q_b).astype(cdt)
    # pooled q_d: sum_i q_d[:,i]*k_u2d[:,i] == sum_t (q_d[:,2t]+q_d[:,2t+1])*k_up[:,t]
    q_dp_c = (jnp.dot(q_w, dsum_c, preferred_element_type=f32)
              + (q_b + q_b)).astype(cdt)

    # ---- per-batch channel-channel (C x C) attention; store incrementally --
    for b in range(bb):                     # static unroll; bb is small
        sl = slice(b * t_up, (b + 1) * t_up)

        s_d2u = jax.lax.dot_general(q_u_c[:, sl], k_d2u_c[:, sl],
                                    (((1,), (1,)), ((), ())),
                                    preferred_element_type=f32)
        a_d2u = _softmax_lastdim(s_d2u).astype(cdt)
        up_delta = jnp.dot(a_d2u, v_d2u_c[:, sl], preferred_element_type=f32)
        up_out_ref[:, sl] = (up_c[:, sl].astype(f32) + up_delta).astype(out_dt)

        s_u2d = jax.lax.dot_general(q_dp_c[:, sl], k_up_c[:, sl],
                                    (((1,), (1,)), ((), ())),
                                    preferred_element_type=f32)
        a_u2d = _softmax_lastdim(s_u2d).astype(cdt)
        dn_delta = jnp.dot(a_u2d, v_up_c[:, sl], preferred_element_type=f32)
        # down_output[:, 2t] and [:, 2t+1] receive the same (repeated) delta.
        de_out_ref[:, sl] = (de_c[:, sl].astype(f32) + dn_delta).astype(out_dt)
        do_out_ref[:, sl] = (do_c[:, sl].astype(f32) + dn_delta).astype(out_dt)


# ---------------------------------------------------------------------------
# Block-batch picker: legal, lane-dense, VMEM-bounded, and (if possible) grid>=2.
# ---------------------------------------------------------------------------
def _pick_block_batch(batch, t_up, bytes_per_lane,
                      target_lanes=2048, vmem_budget=24 << 20):
    lane_cap = max(t_up, vmem_budget // max(bytes_per_lane, 1))
    target = min(max(target_lanes, t_up), lane_cap)
    legal = [bb for bb in range(1, batch + 1)
             if batch % bb == 0 and ((bb * t_up) % 128 == 0 or bb == batch)]
    aligned = [bb for bb in legal if (bb * t_up) % 128 == 0]
    pool = aligned if aligned else legal
    # prefer leaving >= 2 grid steps so the parallel axis can shard across the
    # two v7x TensorCores (no-op on single-TC v5e/v6e).
    multi = [bb for bb in pool if batch // bb >= 2] or pool
    under = [bb for bb in multi if bb * t_up <= target]
    return max(under) if under else min(multi)


# ---------------------------------------------------------------------------
# Wrapper: layout plumbing + weight folding + pallas_call.
# ---------------------------------------------------------------------------
def cross_layer_aggregation(up_input, down_input, params, *,
                            compute_dtype=jnp.bfloat16, out_dtype=None,
                            block_batch=None, single_buffer_weights=False,
                            act_buffering=None):
    B, C, Tu = up_input.shape
    Bd, Cd, Td = down_input.shape
    assert (B, C) == (Bd, Cd)
    c_out = params["q_w"].shape[0]
    assert c_out == C, "module requires in_channels == out_channels"
    # TODO(synk): only the stride-2 pyramid case Td == 2*Tu is supported; other
    # nearest-interp ratios would need an in-kernel lane gather.
    assert Td == 2 * Tu, "kernel supports Td == 2*Tu"

    out_dtype = up_input.dtype if out_dtype is None else out_dtype
    cdt = compute_dtype
    f32 = jnp.float32
    scaler = math.sqrt(c_out)
    cdt_b = jnp.dtype(cdt).itemsize
    out_b = jnp.dtype(out_dtype).itemsize

    # rough per-lane scoped-VMEM cost: double-buffered I/O slabs + live cdt
    # projections + live f32 intermediates.
    bytes_per_lane = C * (4 * 2 * cdt_b + 3 * 2 * out_b + 9 * cdt_b + 10 * 4)
    bb = (_pick_block_batch(B, Tu, bytes_per_lane)
          if block_batch is None else block_batch)
    assert B % bb == 0
    L = bb * Tu

    # ---- wrapper-side layout plumbing (zero FLOPs) -------------------------
    # (B, C, T) -> lane-dense (C, B*T); down split into even / odd / shift-by-1
    # time positions so the k=3/s=2 windows become dense loads in-kernel.
    up_flat = jnp.transpose(up_input, (1, 0, 2)).reshape(C, B * Tu).astype(cdt)
    down_r = down_input.reshape(B, C, Tu, 2)
    down_even = jnp.transpose(down_r[..., 0], (1, 0, 2)).reshape(C, B * Tu).astype(cdt)
    down_odd = jnp.transpose(down_r[..., 1], (1, 0, 2)).reshape(C, B * Tu).astype(cdt)
    down_m1 = jnp.concatenate(   # down[:, :, 2t-1], zero at t == 0
        [jnp.zeros((B, C, 1), down_input.dtype), down_input[:, :, 1:Td - 1:2]], axis=-1)
    down_m1 = jnp.transpose(down_m1, (1, 0, 2)).reshape(C, B * Tu).astype(cdt)

    # ---- parameters: fold psi_2∘psi_1, fold 1/sqrt(C) into q, stack vk -----
    phi_w = params["phi_w"].astype(cdt)
    phi_b = params["phi_b"].reshape(C, 1).astype(f32)
    psi1_w = params["psi1_w"].astype(f32)
    psi1_b = params["psi1_b"].reshape(C, 1).astype(f32)
    psi2_w = params["psi2_w"].astype(f32)                        # (C, C, 3)
    w_taps = [(psi2_w[:, :, j] @ psi1_w).astype(cdt) for j in range(3)]
    b_taps = [psi2_w[:, :, j] @ psi1_b for j in range(3)]        # (C,1) each
    psi_bf = (b_taps[1] + b_taps[2]
              + params["psi2_b"].reshape(C, 1).astype(f32))       # always-on bias
    psi_b0 = b_taps[0]                                            # masked at t==0
    vk_w = params["vk_w"].astype(cdt)                             # (2C, C): [v; k]
    vk_b = params["vk_b"].reshape(2 * C, 1).astype(f32)
    q_w = (params["q_w"] / scaler).astype(cdt)
    q_b = (params["q_b"] / scaler).reshape(C, 1).astype(f32)

    def act_spec():
        if act_buffering is not None:
            return pl.BlockSpec((C, L), lambda i: (0, i),
                                pipeline_mode=pl.Buffered(act_buffering))
        return pl.BlockSpec((C, L), lambda i: (0, i))

    def const_spec(shape):
        nd = len(shape)
        if single_buffer_weights:
            return pl.BlockSpec(shape, lambda i, _nd=nd: (0,) * _nd,
                                pipeline_mode=pl.Buffered(1))
        return pl.BlockSpec(shape, lambda i, _nd=nd: (0,) * _nd)

    out_spec = pl.BlockSpec((C, L), lambda i: (0, i))

    in_specs = (
        [act_spec() for _ in range(4)]
        + [const_spec((C, C)), const_spec((C, 1)),                 # phi
           const_spec((C, C)), const_spec((C, C)), const_spec((C, C)),  # folded psi
           const_spec((C, 1)), const_spec((C, 1)),                 # psi biases
           const_spec((2 * C, C)), const_spec((2 * C, 1)),         # vk (stacked)
           const_spec((C, C)), const_spec((C, 1))]                 # q (pre-scaled)
    )
    out_specs = [out_spec, out_spec, out_spec]
    out_shape = tuple(jax.ShapeDtypeStruct((C, B * Tu), out_dtype) for _ in range(3))

    # raise the scoped VMEM limit only when the per-step estimate needs it.
    est = L * bytes_per_lane + 2 * (7 * C * C * cdt_b + 8 * C * 4)
    vmem_limit = None
    if est > 12 << 20:
        vmem_limit = int(min(max(2 * est, 32 << 20), 64 << 20))

    kernel = functools.partial(_cla_kernel, bb=bb, t_up=Tu, c_out=C)
    up_o, de_o, do_o = pl.pallas_call(
        kernel,
        grid=(B // bb,),
        in_specs=in_specs,
        out_specs=out_specs,
        out_shape=out_shape,
        compiler_params=pltpu.CompilerParams(
            dimension_semantics=("parallel",),
            vmem_limit_bytes=vmem_limit),
    )(up_flat, down_even, down_odd, down_m1,
      phi_w, phi_b, w_taps[0], w_taps[1], w_taps[2], psi_bf, psi_b0,
      vk_w, vk_b, q_w, q_b)

    # ---- un-flatten / re-interleave (layout plumbing) ----------------------
    up_out = jnp.transpose(up_o.reshape(C, B, Tu), (1, 0, 2))
    de_out = jnp.transpose(de_o.reshape(C, B, Tu), (1, 0, 2))
    do_out = jnp.transpose(do_o.reshape(C, B, Tu), (1, 0, 2))
    down_out = jnp.stack([de_out, do_out], axis=-1).reshape(B, C, Td)
    return up_out, down_out


# ---------------------------------------------------------------------------
# Pure-JAX reference (mirrors the PyTorch forward) for verification.
# ---------------------------------------------------------------------------
def ref_forward(up, down, params):
    c_out = params["q_w"].shape[0]
    scaler = math.sqrt(c_out)

    def conv1x1(x, w, b):
        return jnp.einsum("oc,bct->bot", w, x) + b[None, :, None]

    up_plus = up + conv1x1(up, params["phi_w"], params["phi_b"])
    Tu = up.shape[-1]
    Td = down.shape[-1]
    src = (jnp.arange(Td) * Tu) // Td
    up2down = up_plus[:, :, src]

    T_out = (Td + 2 - 3) // 2 + 1
    pad = jnp.pad(down, ((0, 0), (0, 0), (1, 1)), constant_values=-jnp.inf)
    mp = jnp.maximum(jnp.maximum(pad[:, :, 0:2 * T_out:2], pad[:, :, 1:2 * T_out:2]),
                     pad[:, :, 2:2 * T_out + 2:2])

    y1 = conv1x1(down, params["psi1_w"], params["psi1_b"])
    y1p = jnp.pad(y1, ((0, 0), (0, 0), (1, 1)))
    w2 = params["psi2_w"]   # (C_out, C_in, 3)
    psi = sum(jnp.einsum("oc,bct->bot", w2[:, :, j], y1p[:, :, j:j + 2 * T_out:2])
              for j in range(3)) + params["psi2_b"][None, :, None]
    down2up = mp + psi

    vk_u2d = conv1x1(up2down, params["vk_w"], params["vk_b"])
    vk_d2u = conv1x1(down2up, params["vk_w"], params["vk_b"])
    v_u2d, k_u2d = vk_u2d[:, :c_out], vk_u2d[:, c_out:]
    v_d2u, k_d2u = vk_d2u[:, :c_out], vk_d2u[:, c_out:]
    q_u = conv1x1(up, params["q_w"], params["q_b"])
    q_d = conv1x1(down, params["q_w"], params["q_b"])

    attn_d2u = jax.nn.softmax(jnp.einsum("bct,bdt->bcd", q_u, k_d2u) / scaler, axis=-1)
    attn_u2d = jax.nn.softmax(jnp.einsum("bct,bdt->bcd", q_d, k_u2d) / scaler, axis=-1)
    up_out = up + jnp.einsum("bcd,bdt->bct", attn_d2u, v_d2u)
    down_out = down + jnp.einsum("bcd,bdt->bct", attn_u2d, v_u2d)
    return up_out, down_out


def init_params(key, c_in, c_out):
    ks = jax.random.split(key, 10)
    w = lambda k, s: 0.1 * jax.random.normal(k, s, jnp.float32)
    return dict(
        phi_w=w(ks[0], (c_out, c_in)), phi_b=w(ks[1], (c_out,)),
        psi1_w=w(ks[2], (c_out, c_in)), psi1_b=w(ks[3], (c_out,)),
        psi2_w=w(ks[4], (c_out, c_in, 3)), psi2_b=w(ks[5], (c_out,)),
        vk_w=w(ks[6], (2 * c_out, c_in)), vk_b=w(ks[7], (2 * c_out,)),
        q_w=w(ks[8], (c_out, c_in)), q_b=w(ks[9], (c_out,)),
    )


if __name__ == "__main__":
    B, C, Tu, Td = 2, 16, 128, 256      # in_channels == out_channels, Td = 2*Tu
    key = jax.random.PRNGKey(0)
    k_up, k_down, k_par = jax.random.split(key, 3)
    up_input = jax.random.normal(k_up, (B, C, Tu), jnp.float32)
    down_input = jax.random.normal(k_down, (B, C, Td), jnp.float32)
    params = init_params(k_par, C, C)

    ref_u, ref_d = ref_forward(up_input, down_input, params)

    # f32 datapath: tight structural check (diffs: approx softmax recip + psi fold).
    u32, d32 = cross_layer_aggregation(up_input, down_input, params,
                                       compute_dtype=jnp.float32)
    jax.block_until_ready((u32, d32))
    assert jnp.allclose(u32, ref_u, atol=5e-3, rtol=5e-3), "f32 up mismatch"
    assert jnp.allclose(d32, ref_d, atol=5e-3, rtol=5e-3), "f32 down mismatch"

    # bf16 MXU datapath (default): mixed-precision tolerance.
    ubf, dbf = cross_layer_aggregation(up_input, down_input, params)
    jax.block_until_ready((ubf, dbf))
    assert jnp.allclose(ubf, ref_u, atol=5e-2, rtol=5e-2), "bf16 up mismatch"
    assert jnp.allclose(dbf, ref_d, atol=5e-2, rtol=5e-2), "bf16 down mismatch"

    print("KERNEL_OK")
</pallas_src>

<mosaic_0001>
module attributes {stable_mosaic.version = 11 : i64} {
  func.func @_cla_kernel(%arg0: i32, %arg1: memref<16x128xf32, #tpu.memory_space<vmem>>, %arg2: memref<16x128xf32, #tpu.memory_space<vmem>>, %arg3: memref<16x128xf32, #tpu.memory_space<vmem>>, %arg4: memref<16x128xf32, #tpu.memory_space<vmem>>, %arg5: memref<16x16xf32, #tpu.memory_space<vmem>>, %arg6: memref<16x1xf32, #tpu.memory_space<vmem>>, %arg7: memref<16x16xf32, #tpu.memory_space<vmem>>, %arg8: memref<16x16xf32, #tpu.memory_space<vmem>>, %arg9: memref<16x16xf32, #tpu.memory_space<vmem>>, %arg10: memref<16x1xf32, #tpu.memory_space<vmem>>, %arg11: memref<16x1xf32, #tpu.memory_space<vmem>>, %arg12: memref<32x16xf32, #tpu.memory_space<vmem>>, %arg13: memref<32x1xf32, #tpu.memory_space<vmem>>, %arg14: memref<16x16xf32, #tpu.memory_space<vmem>>, %arg15: memref<16x1xf32, #tpu.memory_space<vmem>>, %arg16: memref<16x128xf32, #tpu.memory_space<vmem>>, %arg17: memref<16x128xf32, #tpu.memory_space<vmem>>, %arg18: memref<16x128xf32, #tpu.memory_space<vmem>>) attributes {dimension_semantics = [#tpu.dimension_semantics<parallel>], iteration_bounds = array<i64: 2>, scalar_prefetch = 0 : i64, scratch_operands = 0 : i64, tpu.core_type = #tpu.core_type<tc>, window_params = [{transform_indices = @transform_0, window_bounds = array<i64: 16, 128>}, {transform_indices = @transform_1, window_bounds = array<i64: 16, 128>}, {transform_indices = @transform_2, window_bounds = array<i64: 16, 128>}, {transform_indices = @transform_3, window_bounds = array<i64: 16, 128>}, {pipeline_mode = #tpu.pipeline_mode<synchronous>, transform_indices = @transform_4, window_bounds = array<i64: 16, 16>}, {pipeline_mode = #tpu.pipeline_mode<synchronous>, transform_indices = @transform_5, window_bounds = array<i64: 16, 1>}, {pipeline_mode = #tpu.pipeline_mode<synchronous>, transform_indices = @transform_6, window_bounds = array<i64: 16, 16>}, {pipeline_mode = #tpu.pipeline_mode<synchronous>, transform_indices = @transform_7, window_bounds = array<i64: 16, 16>}, {pipeline_mode = #tpu.pipeline_mode<synchronous>, transform_indices = @transform_8, window_bounds = array<i64: 16, 16>}, {pipeline_mode = #tpu.pipeline_mode<synchronous>, transform_indices = @transform_9, window_bounds = array<i64: 16, 1>}, {pipeline_mode = #tpu.pipeline_mode<synchronous>, transform_indices = @transform_10, window_bounds = array<i64: 16, 1>}, {pipeline_mode = #tpu.pipeline_mode<synchronous>, transform_indices = @transform_11, window_bounds = array<i64: 32, 16>}, {pipeline_mode = #tpu.pipeline_mode<synchronous>, transform_indices = @transform_12, window_bounds = array<i64: 32, 1>}, {pipeline_mode = #tpu.pipeline_mode<synchronous>, transform_indices = @transform_13, window_bounds = array<i64: 16, 16>}, {pipeline_mode = #tpu.pipeline_mode<synchronous>, transform_indices = @transform_14, window_bounds = array<i64: 16, 1>}, {transform_indices = @transform_15, window_bounds = array<i64: 16, 128>}, {transform_indices = @transform_16, window_bounds = array<i64: 16, 128>}, {transform_indices = @transform_17, window_bounds = array<i64: 16, 128>}]} {
    %c0 = arith.constant 0 : index
    %c0_0 = arith.constant 0 : index
    %0 = vector.load %arg1[%c0, %c0_0] : memref<16x128xf32, #tpu.memory_space<vmem>>, vector<16x128xf32>
    %c0_1 = arith.constant 0 : index
    %c0_2 = arith.constant 0 : index
    %1 = vector.load %arg2[%c0_1, %c0_2] : memref<16x128xf32, #tpu.memory_space<vmem>>, vector<16x128xf32>
    %c0_3 = arith.constant 0 : index
    %c0_4 = arith.constant 0 : index
    %2 = vector.load %arg3[%c0_3, %c0_4] : memref<16x128xf32, #tpu.memory_space<vmem>>, vector<16x128xf32>
    %c0_5 = arith.constant 0 : index
    %c0_6 = arith.constant 0 : index
    %3 = vector.load %arg4[%c0_5, %c0_6] : memref<16x128xf32, #tpu.memory_space<vmem>>, vector<16x128xf32>
    %4 = tpu.iota {dimensions = array<i32: 1>} : vector<1x128xi32>
    %c128_i32 = arith.constant 128 : i32
    %c0_i32 = arith.constant 0 : i32
    %5 = arith.cmpi eq, %c128_i32, %c0_i32 : i32
    %c1_i32 = arith.constant 1 : i32
    %6 = arith.select %5, %c1_i32, %c128_i32 : i32
    %7 = vector.broadcast %6 : i32 to vector<1x128xi32>
    %8 = arith.remsi %4, %7 : vector<1x128xi32>
    %c0_i32_7 = arith.constant 0 : i32
    %9 = vector.broadcast %c0_i32_7 : i32 to vector<1x128xi32>
    %10 = arith.cmpi ne, %8, %9 : vector<1x128xi32>
    %c0_i32_8 = arith.constant 0 : i32
    %11 = vector.broadcast %c0_i32_8 : i32 to vector<1x128xi32>
    %12 = arith.cmpi slt, %8, %11 : vector<1x128xi32>
    %c0_i32_9 = arith.constant 0 : i32
    %13 = arith.cmpi slt, %6, %c0_i32_9 : i32
    %14 = vector.broadcast %13 : i1 to vector<1x128xi1>
    %15 = vector.broadcast %14 : vector<1x128xi1> to vector<1x128xi1>
    %16 = arith.xori %12, %15 : vector<1x128xi1>
    %17 = arith.andi %16, %10 : vector<1x128xi1>
    %18 = vector.broadcast %6 : i32 to vector<1x128xi32>
    %19 = arith.addi %8, %18 : vector<1x128xi32>
    %20 = arith.select %17, %19, %8 : vector<1x128xi1>, vector<1x128xi32>
    %c0_i32_10 = arith.constant 0 : i32
    %21 = vector.broadcast %c0_i32_10 : i32 to vector<1x128xi32>
    %22 = arith.cmpi ne, %20, %21 : vector<1x128xi32>
    %c0_11 = arith.constant 0 : index
    %c0_12 = arith.constant 0 : index
    %23 = vector.load %arg5[%c0_11, %c0_12] : memref<16x16xf32, #tpu.memory_space<vmem>>, vector<16x16xf32>
    %cst = arith.constant dense<0.000000e+00> : vector<16x128xf32>
    %24 = tpu.matmul %23, %0, %cst {dimension_numbers = #tpu.dot_dimension_numbers<[1], [0], [0], [1], [0, 0, 1, 1], [], []>} : vector<16x16xf32>, vector<16x128xf32>, vector<16x128xf32> -> vector<16x128xf32>
    %25 = arith.addf %0, %24 : vector<16x128xf32>
    %c0_13 = arith.constant 0 : index
    %c0_14 = arith.constant 0 : index
    %26 = vector.load %arg6[%c0_13, %c0_14] : memref<16x1xf32, #tpu.memory_space<vmem>>, vector<16x1xf32>
    %27 = vector.broadcast %26 : vector<16x1xf32> to vector<16x128xf32>
    %28 = arith.addf %25, %27 : vector<16x128xf32>
    %c0_15 = arith.constant 0 : index
    %c0_16 = arith.constant 0 : index
    %29 = vector.load %arg12[%c0_15, %c0_16] : memref<32x16xf32, #tpu.memory_space<vmem>>, vector<32x16xf32>
    %cst_17 = arith.constant dense<0.000000e+00> : vector<32x128xf32>
    %30 = tpu.matmul %29, %28, %cst_17 {dimension_numbers = #tpu.dot_dimension_numbers<[1], [0], [0], [1], [0, 0, 1, 1], [], []>} : vector<32x16xf32>, vector<16x128xf32>, vector<32x128xf32> -> vector<32x128xf32>
    %c0_18 = arith.constant 0 : index
    %c0_19 = arith.constant 0 : index
    %31 = vector.load %arg13[%c0_18, %c0_19] : memref<32x1xf32, #tpu.memory_space<vmem>>, vector<32x1xf32>
    %32 = vector.broadcast %31 : vector<32x1xf32> to vector<32x128xf32>
    %33 = arith.addf %30, %32 : vector<32x128xf32>
    %34 = vector.extract_strided_slice %33 {offsets = [0, 0], sizes = [16, 128], strides = [1, 1]} : vector<32x128xf32> to vector<16x128xf32>
    %35 = vector.extract_strided_slice %33 {offsets = [16, 0], sizes = [16, 128], strides = [1, 1]} : vector<32x128xf32> to vector<16x128xf32>
    %36 = arith.maximumf %1, %2 : vector<16x128xf32>
    %cst_20 = arith.constant 0xFF800000 : f32
    %37 = vector.shape_cast %22 : vector<1x128xi1> to vector<1x128xi1>
    %38 = vector.broadcast %37 : vector<1x128xi1> to vector<16x128xi1>
    %39 = vector.broadcast %cst_20 : f32 to vector<16x128xf32>
    %40 = arith.select %38, %3, %39 : vector<16x128xi1>, vector<16x128xf32>
    %41 = arith.maximumf %36, %40 : vector<16x128xf32>
    %42 = arith.addf %1, %2 : vector<16x128xf32>
    %c0_21 = arith.constant 0 : index
    %c0_22 = arith.constant 0 : index
    %43 = vector.load %arg7[%c0_21, %c0_22] : memref<16x16xf32, #tpu.memory_space<vmem>>, vector<16x16xf32>
    %cst_23 = arith.constant dense<0.000000e+00> : vector<16x128xf32>
    %44 = tpu.matmul %43, %3, %cst_23 {dimension_numbers = #tpu.dot_dimension_numbers<[1], [0], [0], [1], [0, 0, 1, 1], [], []>} : vector<16x16xf32>, vector<16x128xf32>, vector<16x128xf32> -> vector<16x128xf32>
    %c0_24 = arith.constant 0 : index
    %c0_25 = arith.constant 0 : index
    %45 = vector.load %arg8[%c0_24, %c0_25] : memref<16x16xf32, #tpu.memory_space<vmem>>, vector<16x16xf32>
    %cst_26 = arith.constant dense<0.000000e+00> : vector<16x128xf32>
    %46 = tpu.matmul %45, %1, %cst_26 {dimension_numbers = #tpu.dot_dimension_numbers<[1], [0], [0], [1], [0, 0, 1, 1], [], []>} : vector<16x16xf32>, vector<16x128xf32>, vector<16x128xf32> -> vector<16x128xf32>
    %47 = arith.addf %44, %46 : vector<16x128xf32>
    %c0_27 = arith.constant 0 : index
    %c0_28 = arith.constant 0 : index
    %48 = vector.load %arg9[%c0_27, %c0_28] : memref<16x16xf32, #tpu.memory_space<vmem>>, vector<16x16xf32>
    %cst_29 = arith.constant dense<0.000000e+00> : vector<16x128xf32>
    %49 = tpu.matmul %48, %2, %cst_29 {dimension_numbers = #tpu.dot_dimension_numbers<[1], [0], [0], [1], [0, 0, 1, 1], [], []>} : vector<16x16xf32>, vector<16x128xf32>, vector<16x128xf32> -> vector<16x128xf32>
    %50 = arith.addf %47, %49 : vector<16x128xf32>
    %c0_30 = arith.constant 0 : index
    %c0_31 = arith.constant 0 : index
    %51 = vector.load %arg10[%c0_30, %c0_31] : memref<16x1xf32, #tpu.memory_space<vmem>>, vector<16x1xf32>
    %52 = vector.broadcast %51 : vector<16x1xf32> to vector<16x128xf32>
    %53 = arith.addf %50, %52 : vector<16x128xf32>
    %c0_32 = arith.constant 0 : index
    %c0_33 = arith.constant 0 : index
    %54 = vector.load %arg11[%c0_32, %c0_33] : memref<16x1xf32, #tpu.memory_space<vmem>>, vector<16x1xf32>
    %55 = arith.extui %22 : vector<1x128xi1> to vector<1x128xi32>
    %56 = arith.sitofp %55 : vector<1x128xi32> to vector<1x128xf32>
    %57 = vector.broadcast %54 : vector<16x1xf32> to vector<16x128xf32>
    %58 = vector.broadcast %56 : vector<1x128xf32> to vector<16x128xf32>
    %59 = arith.mulf %57, %58 : vector<16x128xf32>
    %60 = arith.addf %53, %59 : vector<16x128xf32>
    %61 = arith.addf %41, %60 : vector<16x128xf32>
    %c0_34 = arith.constant 0 : index
    %c0_35 = arith.constant 0 : index
    %62 = vector.load %arg12[%c0_34, %c0_35] : memref<32x16xf32, #tpu.memory_space<vmem>>, vector<32x16xf32>
    %cst_36 = arith.constant dense<0.000000e+00> : vector<32x128xf32>
    %63 = tpu.matmul %62, %61, %cst_36 {dimension_numbers = #tpu.dot_dimension_numbers<[1], [0], [0], [1], [0, 0, 1, 1], [], []>} : vector<32x16xf32>, vector<16x128xf32>, vector<32x128xf32> -> vector<32x128xf32>
    %c0_37 = arith.constant 0 : index
    %c0_38 = arith.constant 0 : index
    %64 = vector.load %arg13[%c0_37, %c0_38] : memref<32x1xf32, #tpu.memory_space<vmem>>, vector<32x1xf32>
    %65 = vector.broadcast %64 : vector<32x1xf32> to vector<32x128xf32>
    %66 = arith.addf %63, %65 : vector<32x128xf32>
    %67 = vector.extract_strided_slice %66 {offsets = [0, 0], sizes = [16, 128], strides = [1, 1]} : vector<32x128xf32> to vector<16x128xf32>
    %68 = vector.extract_strided_slice %66 {offsets = [16, 0], sizes = [16, 128], strides = [1, 1]} : vector<32x128xf32> to vector<16x128xf32>
    %c0_39 = arith.constant 0 : index
    %c0_40 = arith.constant 0 : index
    %69 = vector.load %arg14[%c0_39, %c0_40] : memref<16x16xf32, #tpu.memory_space<vmem>>, vector<16x16xf32>
    %c0_41 = arith.constant 0 : index
    %c0_42 = arith.constant 0 : index
    %70 = vector.load %arg15[%c0_41, %c0_42] : memref<16x1xf32, #tpu.memory_space<vmem>>, vector<16x1xf32>
    %cst_43 = arith.constant dense<0.000000e+00> : vector<16x128xf32>
    %71 = tpu.matmul %69, %0, %cst_43 {dimension_numbers = #tpu.dot_dimension_numbers<[1], [0], [0], [1], [0, 0, 1, 1], [], []>} : vector<16x16xf32>, vector<16x128xf32>, vector<16x128xf32> -> vector<16x128xf32>
    %72 = vector.broadcast %70 : vector<16x1xf32> to vector<16x128xf32>
    %73 = arith.addf %71, %72 : vector<16x128xf32>
    %cst_44 = arith.constant dense<0.000000e+00> : vector<16x128xf32>
    %74 = tpu.matmul %69, %42, %cst_44 {dimension_numbers = #tpu.dot_dimension_numbers<[1], [0], [0], [1], [0, 0, 1, 1], [], []>} : vector<16x16xf32>, vector<16x128xf32>, vector<16x128xf32> -> vector<16x128xf32>
    %75 = arith.addf %70, %70 : vector<16x1xf32>
    %76 = vector.broadcast %75 : vector<16x1xf32> to vector<16x128xf32>
    %77 = arith.addf %74, %76 : vector<16x128xf32>
    %cst_45 = arith.constant dense<0.000000e+00> : vector<16x16xf32>
    %78 = tpu.matmul %73, %68, %cst_45 {dimension_numbers = #tpu.dot_dimension_numbers<[1], [1], [0], [0], [0, 0, 1, 0], [], []>} : vector<16x128xf32>, vector<16x128xf32>, vector<16x16xf32> -> vector<16x16xf32>
    %cst_46 = arith.constant dense<0xFF800000> : vector<16xf32>
    %79 = vector.multi_reduction <maximumf>, %78, %cst_46 [1] : vector<16x16xf32> to vector<16xf32>
    %80 = vector.shape_cast %79 : vector<16xf32> to vector<16x1xf32>
    %81 = vector.broadcast %80 : vector<16x1xf32> to vector<16x16xf32>
    %82 = arith.subf %78, %81 : vector<16x16xf32>
    %83 = math.exp %82 : vector<16x16xf32>
    %cst_47 = arith.constant dense<0.000000e+00> : vector<16xf32>
    %84 = vector.multi_reduction <add>, %83, %cst_47 [1] : vector<16x16xf32> to vector<16xf32>
    %85 = vector.shape_cast %84 : vector<16xf32> to vector<16x1xf32>
    %86 = tpu.reciprocal %85 {approx = true} : vector<16x1xf32> -> vector<16x1xf32>
    %87 = vector.broadcast %86 : vector<16x1xf32> to vector<16x16xf32>
    %88 = arith.mulf %83, %87 : vector<16x16xf32>
    %cst_48 = arith.constant dense<0.000000e+00> : vector<16x128xf32>
    %89 = tpu.matmul %88, %67, %cst_48 {dimension_numbers = #tpu.dot_dimension_numbers<[1], [0], [0], [1], [0, 0, 1, 1], [], []>} : vector<16x16xf32>, vector<16x128xf32>, vector<16x128xf32> -> vector<16x128xf32>
    %90 = arith.addf %0, %89 : vector<16x128xf32>
    %c0_49 = arith.constant 0 : index
    %c0_50 = arith.constant 0 : index
    %91 = vector.load %arg16[%c0_49, %c0_50] : memref<16x128xf32, #tpu.memory_space<vmem>>, vector<16x128xf32>
    tpu.vector_store %arg16[%c0_49, %c0_50], %90 {strides = array<i32>} : memref<16x128xf32, #tpu.memory_space<vmem>>, vector<16x128xf32>,
    %cst_51 = arith.constant dense<0.000000e+00> : vector<16x16xf32>
    %92 = tpu.matmul %77, %35, %cst_51 {dimension_numbers = #tpu.dot_dimension_numbers<[1], [1], [0], [0], [0, 0, 1, 0], [], []>} : vector<16x128xf32>, vector<16x128xf32>, vector<16x16xf32> -> vector<16x16xf32>
    %cst_52 = arith.constant dense<0xFF800000> : vector<16xf32>
    %93 = vector.multi_reduction <maximumf>, %92, %cst_52 [1] : vector<16x16xf32> to vector<16xf32>
    %94 = vector.shape_cast %93 : vector<16xf32> to vector<16x1xf32>
    %95 = vector.broadcast %94 : vector<16x1xf32> to vector<16x16xf32>
    %96 = arith.subf %92, %95 : vector<16x16xf32>
    %97 = math.exp %96 : vector<16x16xf32>
    %cst_53 = arith.constant dense<0.000000e+00> : vector<16xf32>
    %98 = vector.multi_reduction <add>, %97, %cst_53 [1] : vector<16x16xf32> to vector<16xf32>
    %99 = vector.shape_cast %98 : vector<16xf32> to vector<16x1xf32>
    %100 = tpu.reciprocal %99 {approx = true} : vector<16x1xf32> -> vector<16x1xf32>
    %101 = vector.broadcast %100 : vector<16x1xf32> to vector<16x16xf32>
    %102 = arith.mulf %97, %101 : vector<16x16xf32>
    %cst_54 = arith.constant dense<0.000000e+00> : vector<16x128xf32>
    %103 = tpu.matmul %102, %34, %cst_54 {dimension_numbers = #tpu.dot_dimension_numbers<[1], [0], [0], [1], [0, 0, 1, 1], [], []>} : vector<16x16xf32>, vector<16x128xf32>, vector<16x128xf32> -> vector<16x128xf32>
    %104 = arith.addf %1, %103 : vector<16x128xf32>
    %c0_55 = arith.constant 0 : index
    %c0_56 = arith.constant 0 : index
    %105 = vector.load %arg17[%c0_55, %c0_56] : memref<16x128xf32, #tpu.memory_space<vmem>>, vector<16x128xf32>
    tpu.vector_store %arg17[%c0_55, %c0_56], %104 {strides = array<i32>} : memref<16x128xf32, #tpu.memory_space<vmem>>, vector<16x128xf32>,
    %106 = arith.addf %2, %103 : vector<16x128xf32>
    %c0_57 = arith.constant 0 : index
    %c0_58 = arith.constant 0 : index
    %107 = vector.load %arg18[%c0_57, %c0_58] : memref<16x128xf32, #tpu.memory_space<vmem>>, vector<16x128xf32>
    tpu.vector_store %arg18[%c0_57, %c0_58], %106 {strides = array<i32>} : memref<16x128xf32, #tpu.memory_space<vmem>>, vector<16x128xf32>,
    return
  }
  func.func @transform_0(%arg0: i32) -> (i32, i32) {
    %c0_i32 = arith.constant 0 : i32
    %c0_i32_0 = arith.constant 0 : i32
    return %c0_i32, %arg0 : i32, i32
  }
  func.func @transform_1(%arg0: i32) -> (i32, i32) {
    %c0_i32 = arith.constant 0 : i32
    %c0_i32_0 = arith.constant 0 : i32
    return %c0_i32, %arg0 : i32, i32
  }
  func.func @transform_2(%arg0: i32) -> (i32, i32) {
    %c0_i32 = arith.constant 0 : i32
    %c0_i32_0 = arith.constant 0 : i32
    return %c0_i32, %arg0 : i32, i32
  }
  func.func @transform_3(%arg0: i32) -> (i32, i32) {
    %c0_i32 = arith.constant 0 : i32
    %c0_i32_0 = arith.constant 0 : i32
    return %c0_i32, %arg0 : i32, i32
  }
  func.func @transform_4(%arg0: i32) -> (i32, i32) {
    %c0_i32 = arith.constant 0 : i32
    %c0_i32_0 = arith.constant 0 : i32
    %c0_i32_1 = arith.constant 0 : i32
    return %c0_i32, %c0_i32_0 : i32, i32
  }
  func.func @transform_5(%arg0: i32) -> (i32, i32) {
    %c0_i32 = arith.constant 0 : i32
    %c0_i32_0 = arith.constant 0 : i32
    %c0_i32_1 = arith.constant 0 : i32
    return %c0_i32, %c0_i32_0 : i32, i32
  }
  func.func @transform_6(%arg0: i32) -> (i32, i32) {
    %c0_i32 = arith.constant 0 : i32
    %c0_i32_0 = arith.constant 0 : i32
    %c0_i32_1 = arith.constant 0 : i32
    return %c0_i32, %c0_i32_0 : i32, i32
  }
  func.func @transform_7(%arg0: i32) -> (i32, i32) {
    %c0_i32 = arith.constant 0 : i32
    %c0_i32_0 = arith.constant 0 : i32
    %c0_i32_1 = arith.constant 0 : i32
    return %c0_i32, %c0_i32_0 : i32, i32
  }
  func.func @transform_8(%arg0: i32) -> (i32, i32) {
    %c0_i32 = arith.constant 0 : i32
    %c0_i32_0 = arith.constant 0 : i32
    %c0_i32_1 = arith.constant 0 : i32
    return %c0_i32, %c0_i32_0 : i32, i32
  }
  func.func @transform_9(%arg0: i32) -> (i32, i32) {
    %c0_i32 = arith.constant 0 : i32
    %c0_i32_0 = arith.constant 0 : i32
    %c0_i32_1 = arith.constant 0 : i32
    return %c0_i32, %c0_i32_0 : i32, i32
  }
  func.func @transform_10(%arg0: i32) -> (i32, i32) {
    %c0_i32 = arith.constant 0 : i32
    %c0_i32_0 = arith.constant 0 : i32
    %c0_i32_1 = arith.constant 0 : i32
    return %c0_i32, %c0_i32_0 : i32, i32
  }
  func.func @transform_11(%arg0: i32) -> (i32, i32) {
    %c0_i32 = arith.constant 0 : i32
    %c0_i32_0 = arith.constant 0 : i32
    %c0_i32_1 = arith.constant 0 : i32
    return %c0_i32, %c0_i32_0 : i32, i32
  }
  func.func @transform_12(%arg0: i32) -> (i32, i32) {
    %c0_i32 = arith.constant 0 : i32
    %c0_i32_0 = arith.constant 0 : i32
    %c0_i32_1 = arith.constant 0 : i32
    return %c0_i32, %c0_i32_0 : i32, i32
  }
  func.func @transform_13(%arg0: i32) -> (i32, i32) {
    %c0_i32 = arith.constant 0 : i32
    %c0_i32_0 = arith.constant 0 : i32
    %c0_i32_1 = arith.constant 0 : i32
    return %c0_i32, %c0_i32_0 : i32, i32
  }
  func.func @transform_14(%arg0: i32) -> (i32, i32) {
    %c0_i32 = arith.constant 0 : i32
    %c0_i32_0 = arith.constant 0 : i32
    %c0_i32_1 = arith.constant 0 : i32
    return %c0_i32, %c0_i32_0 : i32, i32
  }
  func.func @transform_15(%arg0: i32) -> (i32, i32) {
    %c0_i32 = arith.constant 0 : i32
    %c0_i32_0 = arith.constant 0 : i32
    return %c0_i32, %arg0 : i32, i32
  }
  func.func @transform_16(%arg0: i32) -> (i32, i32) {
    %c0_i32 = arith.constant 0 : i32
    %c0_i32_0 = arith.constant 0 : i32
    return %c0_i32, %arg0 : i32, i32
  }
  func.func @transform_17(%arg0: i32) -> (i32, i32) {
    %c0_i32 = arith.constant 0 : i32
    %c0_i32_0 = arith.constant 0 : i32
    return %c0_i32, %arg0 : i32, i32
  }
}

</mosaic_0001>

<llo_original>
// kernel: tpu_custom_call.1
$region0: #{tpu_custom_call.1}
  #allocation0 [shape = 'u32[]', space=smem, size = 0x4, offset = 0x4, fixed_abs, tag = 'smem constant byte address 0x4 - core index']
  #allocation1 [shape = 'u32[144,128]{1,0:T(1,128)}', space=vmem, size = 0x12000, scoped, tag = 'internal scratch']
  %s0 = inlined_call_operand.vmem [shape: f32[16,256], index: 0, kind: input, shape index: {}]
  %s1 = inlined_call_operand.vmem [shape: f32[16,256], index: 1, kind: input, shape index: {}]
  %s2 = inlined_call_operand.vmem [shape: f32[16,256], index: 2, kind: input, shape index: {}]
  %s3 = inlined_call_operand.vmem [shape: f32[16,256], index: 3, kind: input, shape index: {}]
  %s4 = inlined_call_operand.vmem [shape: f32[16,16], index: 4, kind: input, shape index: {}]
  %s5 = inlined_call_operand.vmem [shape: f32[16,1], index: 5, kind: input, shape index: {}]
  %s6 = inlined_call_operand.hbm [shape: f32[16,16], index: 6, kind: input, shape index: {}]
  %s7 = inlined_call_operand.hbm [shape: f32[16,16], index: 7, kind: input, shape index: {}]
  %s8 = inlined_call_operand.vmem [shape: f32[16,16], index: 8, kind: input, shape index: {}]
  %s9 = inlined_call_operand.vmem [shape: f32[16,1], index: 9, kind: input, shape index: {}]
  %s10 = inlined_call_operand.vmem [shape: f32[16,1], index: 10, kind: input, shape index: {}]
  %s11 = inlined_call_operand.vmem [shape: f32[32,16], index: 11, kind: input, shape index: {}]
  %s12 = inlined_call_operand.vmem [shape: f32[32,1], index: 12, kind: input, shape index: {}]
  %s13 = inlined_call_operand.vmem [shape: f32[16,16], index: 13, kind: input, shape index: {}]
  %s14 = inlined_call_operand.vmem [shape: f32[16,1], index: 14, kind: input, shape index: {}]
  %s15 = inlined_call_operand.hbm [shape: f32[16,256], index: 15, kind: output, shape index: {0}]
  %s16 = inlined_call_operand.hbm [shape: f32[16,256], index: 16, kind: output, shape index: {1}]
  %s17 = inlined_call_operand.hbm [shape: f32[16,256], index: 17, kind: output, shape index: {2}]
  %18 = xla_tuple %s15, %s16, %s17
  %s19 = sld [smem:[#allocation0]]
  $region269: #{tpu_custom_call.1} parent=0
    _
  %s21 = ssub.s32 1, %s19
  %s22 = scalar_select 0, %s21, %s19
  $region1: #{tpu_custom_call.1} parent=0
    #allocation2 [shape = 'u8[16384]{0}', space=vmem, size = 0x4000, scoped, tag = 'input window, operand 0']
    #allocation3 [shape = 'u8[16384]{0}', space=vmem, size = 0x4000, scoped, tag = 'input window, operand 1']
    #allocation4 [shape = 'u8[16384]{0}', space=vmem, size = 0x4000, scoped, tag = 'input window, operand 2']
    #allocation5 [shape = 'u8[16384]{0}', space=vmem, size = 0x4000, scoped, tag = 'input window, operand 3']
    #allocation6 [shape = 'u8[8192]{0}', space=vmem, size = 0x2000, scoped, tag = 'input window, operand 6, single buffered']
    #allocation7 [shape = 's32[2]{0}', space=sflag, size = 0x8, scoped, tag = 'scoped memory for tpu_custom_call.1']
    #allocation8 [shape = 's32[2]{0}', space=sflag, size = 0x8, scoped, tag = 'scoped memory for tpu_custom_call.1']
    #allocation9 [shape = 'u8[8192]{0}', space=vmem, size = 0x2000, scoped, tag = 'input window, operand 7, single buffered']
    #allocation10 [shape = 's32[1]{0}', space=sflag, size = 0x4, scoped, tag = 'scoped memory for tpu_custom_call.1']
    #allocation11 [shape = 'u8[16384]{0}', space=vmem, size = 0x4000, scoped, tag = 'output window, operand 0']
    #allocation12 [shape = 'u8[16384]{0}', space=vmem, size = 0x4000, scoped, tag = 'output window, operand 1']
    #allocation13 [shape = 's32[2]{0}', space=sflag, size = 0x8, scoped, tag = 'scoped memory for tpu_custom_call.1']
    #allocation14 [shape = 'u8[16384]{0}', space=vmem, size = 0x4000, scoped, tag = 'output window, operand 2']
    %23 = vsyncpa [#allocation7], 0
    %24 = vsyncpa [#allocation10], 0
    %25 = vsyncpa [#allocation8], 0
    %s26 = scalar_lea.sflag [#allocation8], 1
    %27 = vsyncpa %s26, 0
    %28 = vsyncpa [#allocation13], 0
    %s29 = scalar_lea.sflag [#allocation13], 1
    %30 = vsyncpa %s29, 0
    loop: start=0, step=1, limit=4
    $region2: #{tpu_custom_call.1} parent=1 // loop_pre_header
      _
    $region3: #{tpu_custom_call.1} parent=1 // loop_header
      %s32 = sphi 0, %s36
      %p33 = scmp.ge.s32.totalorder %s32, 4
      %s42 = sphi 0, %s44
      %s45 = sphi 0, %s42
      %s46 = sphi 0, %s45
      %s62 = sphi 0, %s46
      %s68 = sphi 0, %s70
      %s71 = sphi 0, %s68
      %s72 = sphi 0, %s71
      %s88 = sphi 0, %s72
      %s94 = sphi 0, %s96
      %s97 = sphi 0, %s94
      %s98 = sphi 0, %s97
      %s114 = sphi 0, %s98
      %s120 = sphi 0, %s122
      %s123 = sphi 0, %s120
      %s124 = sphi 0, %s123
      %s140 = sphi 0, %s124
      %s144 = sphi 0, %s144
      %s146 = sphi 0, %s144
      %s147 = sphi 0, %s146
      %s161 = sphi 0, %s147
      %s165 = sphi 0, %s165
      %s167 = sphi 0, %s165
      %s168 = sphi 0, %s167
      %s182 = sphi 0, %s168
      %s186 = sphi 0, %s186
      %s188 = sphi 0, %s186
      %s189 = sphi 0, %s188
      %s203 = sphi 0, %s189
      %s207 = sphi 0, %s207
      %s209 = sphi 0, %s207
      %s210 = sphi 0, %s209
      %s224 = sphi 0, %s210
      %s228 = sphi 0, %s228
      %s230 = sphi 0, %s228
      %s231 = sphi 0, %s230
      %s245 = sphi 0, %s231
      %s249 = sphi 0, %s249
      %s251 = sphi 0, %s249
      %s252 = sphi 0, %s251
      %s266 = sphi 0, %s252
      %s270 = sphi 0, %s270
      %s272 = sphi 0, %s270
      %s273 = sphi 0, %s272
      %s287 = sphi 0, %s273
      %s291 = sphi 0, %s291
      %s293 = sphi 0, %s291
      %s294 = sphi 0, %s293
      %s308 = sphi 0, %s294
      %s312 = sphi 0, %s312
      %s314 = sphi 0, %s312
      %s315 = sphi 0, %s314
      %s329 = sphi 0, %s315
      %s333 = sphi 0, %s333
      %s335 = sphi 0, %s333
      %s336 = sphi 0, %s335
      %s350 = sphi 0, %s336
      %s354 = sphi 0, %s354
      %s356 = sphi 0, %s354
      %s357 = sphi 0, %s356
      %s371 = sphi 0, %s357
      %s377 = sphi 0, %s379
      %s380 = sphi 0, %s377
      %s381 = sphi 0, %s380
      %s397 = sphi 0, %s381
      %s403 = sphi 0, %s405
      %s406 = sphi 0, %s403
      %s407 = sphi 0, %s406
      %s423 = sphi 0, %s407
      %s429 = sphi 0, %s431
      %s432 = sphi 0, %s429
      %s433 = sphi 0, %s432
      %s449 = sphi 0, %s433
    $region4: #{tpu_custom_call.1} parent=1 // loop_header_branch
      %35 = sbr.rel (%p33) target = $region8
    $region5: #{tpu_custom_call.1} parent=1 // loop_body
      %s37 = ssub.s32 %s32, 1
      %s38 = ssub.s32 %s32, 2
      %s39 = sadd.s32 %s32, 1
      %s40 = ssub.s32 %s32, %s39
      %p41 = scmp.eq.s32.totalorder %s40, 0
      %s43 = sadd.s32 %s42, 1
      %s44 = scalar_select %p41, %s42, %s43
      %p47 = pneg %p41
      %p48 = scmp.eq.s32.totalorder %s32, 1
      %p49 = por %p47, %p48
      %p50 = scmp.ne.s32.totalorder %s42, %s45
      %p51 = scmp.eq.s32.totalorder %s32, 0
      %p52 = por %p50, %p51
      %p53 = scmp.ne.s32.totalorder %s42, %s45
      %p54 = scmp.eq.s32.totalorder %s37, 1
      %p55 = por %p53, %p54
      %p56 = scmp.ne.s32.totalorder %s45, %s46
      %p57 = scmp.eq.s32.totalorder %s37, 0
      %p58 = por %p56, %p57
      %p59 = scmp.ne.s32.totalorder %s45, %s46
      %p60 = scmp.eq.s32.totalorder %s38, 1
      %p61 = por %p59, %p60
      %p63 = scmp.ne.s32.totalorder %s46, %s62
      %p64 = scmp.eq.s32.totalorder %s38, 0
      %p65 = por %p63, %p64
      %s66 = ssub.s32 %s32, %s39
      %p67 = scmp.eq.s32.totalorder %s66, 0
      %s69 = sadd.s32 %s68, 1
      %s70 = scalar_select %p67, %s68, %s69
      %p73 = pneg %p67
      %p74 = scmp.eq.s32.totalorder %s32, 1
      %p75 = por %p73, %p74
      %p76 = scmp.ne.s32.totalorder %s68, %s71
      %p77 = scmp.eq.s32.totalorder %s32, 0
      %p78 = por %p76, %p77
      %p79 = scmp.ne.s32.totalorder %s68, %s71
      %p80 = scmp.eq.s32.totalorder %s37, 1
      %p81 = por %p79, %p80
      %p82 = scmp.ne.s32.totalorder %s71, %s72
      %p83 = scmp.eq.s32.totalorder %s37, 0
      %p84 = por %p82, %p83
      %p85 = scmp.ne.s32.totalorder %s71, %s72
      %p86 = scmp.eq.s32.totalorder %s38, 1
      %p87 = por %p85, %p86
      %p89 = scmp.ne.s32.totalorder %s72, %s88
      %p90 = scmp.eq.s32.totalorder %s38, 0
      %p91 = por %p89, %p90
      %s92 = ssub.s32 %s32, %s39
      %p93 = scmp.eq.s32.totalorder %s92, 0
      %s95 = sadd.s32 %s94, 1
      %s96 = scalar_select %p93, %s94, %s95
      %p99 = pneg %p93
      %p100 = scmp.eq.s32.totalorder %s32, 1
      %p101 = por %p99, %p100
      %p102 = scmp.ne.s32.totalorder %s94, %s97
      %p103 = scmp.eq.s32.totalorder %s32, 0
      %p104 = por %p102, %p103
      %p105 = scmp.ne.s32.totalorder %s94, %s97
      %p106 = scmp.eq.s32.totalorder %s37, 1
      %p107 = por %p105, %p106
      %p108 = scmp.ne.s32.totalorder %s97, %s98
      %p109 = scmp.eq.s32.totalorder %s37, 0
      %p110 = por %p108, %p109
      %p111 = scmp.ne.s32.totalorder %s97, %s98
      %p112 = scmp.eq.s32.totalorder %s38, 1
      %p113 = por %p111, %p112
      %p115 = scmp.ne.s32.totalorder %s98, %s114
      %p116 = scmp.eq.s32.totalorder %s38, 0
      %p117 = por %p115, %p116
      %s118 = ssub.s32 %s32, %s39
      %p119 = scmp.eq.s32.totalorder %s118, 0
      %s121 = sadd.s32 %s120, 1
      %s122 = scalar_select %p119, %s120, %s121
      %p125 = pneg %p119
      %p126 = scmp.eq.s32.totalorder %s32, 1
      %p127 = por %p125, %p126
      %p128 = scmp.ne.s32.totalorder %s120, %s123
      %p129 = scmp.eq.s32.totalorder %s32, 0
      %p130 = por %p128, %p129
      %p131 = scmp.ne.s32.totalorder %s120, %s123
      %p132 = scmp.eq.s32.totalorder %s37, 1
      %p133 = por %p131, %p132
      %p134 = scmp.ne.s32.totalorder %s123, %s124
      %p135 = scmp.eq.s32.totalorder %s37, 0
      %p136 = por %p134, %p135
      %p137 = scmp.ne.s32.totalorder %s123, %s124
      %p138 = scmp.eq.s32.totalorder %s38, 1
      %p139 = por %p137, %p138
      %p141 = scmp.ne.s32.totalorder %s124, %s140
      %p142 = scmp.eq.s32.totalorder %s38, 0
      %p143 = por %p141, %p142
      %s145 = sadd.s32 %s144, 1
      %p148 = scmp.eq.s32.totalorder %s32, 1
      %p149 = scmp.ne.s32.totalorder %s144, %s146
      %p150 = scmp.eq.s32.totalorder %s32, 0
      %p151 = por %p149, %p150
      %p152 = scmp.ne.s32.totalorder %s144, %s146
      %p153 = scmp.eq.s32.totalorder %s37, 1
      %p154 = por %p152, %p153
      %p155 = scmp.ne.s32.totalorder %s146, %s147
      %p156 = scmp.eq.s32.totalorder %s37, 0
      %p157 = por %p155, %p156
      %p158 = scmp.ne.s32.totalorder %s146, %s147
      %p159 = scmp.eq.s32.totalorder %s38, 1
      %p160 = por %p158, %p159
      %p162 = scmp.ne.s32.totalorder %s147, %s161
      %p163 = scmp.eq.s32.totalorder %s38, 0
      %p164 = por %p162, %p163
      %s166 = sadd.s32 %s165, 1
      %p169 = scmp.eq.s32.totalorder %s32, 1
      %p170 = scmp.ne.s32.totalorder %s165, %s167
      %p171 = scmp.eq.s32.totalorder %s32, 0
      %p172 = por %p170, %p171
      %p173 = scmp.ne.s32.totalorder %s165, %s167
      %p174 = scmp.eq.s32.totalorder %s37, 1
      %p175 = por %p173, %p174
      %p176 = scmp.ne.s32.totalorder %s167, %s168
      %p177 = scmp.eq.s32.totalorder %s37, 0
      %p178 = por %p176, %p177
      %p179 = scmp.ne.s32.totalorder %s167, %s168
      %p180 = scmp.eq.s32.totalorder %s38, 1
      %p181 = por %p179, %p180
      %p183 = scmp.ne.s32.totalorder %s168, %s182
      %p184 = scmp.eq.s32.totalorder %s38, 0
      %p185 = por %p183, %p184
      %s187 = sadd.s32 %s186, 1
      %p190 = scmp.eq.s32.totalorder %s32, 1
      %p191 = scmp.ne.s32.totalorder %s186, %s188
      %p192 = scmp.eq.s32.totalorder %s32, 0
      %p193 = por %p191, %p192
      %p194 = scmp.ne.s32.totalorder %s186, %s188
      %p195 = scmp.eq.s32.totalorder %s37, 1
      %p196 = por %p194, %p195
      %p197 = scmp.ne.s32.totalorder %s188, %s189
      %p198 = scmp.eq.s32.totalorder %s37, 0
      %p199 = por %p197, %p198
      %p200 = scmp.ne.s32.totalorder %s188, %s189
      %p201 = scmp.eq.s32.totalorder %s38, 1
      %p202 = por %p200, %p201
      %p204 = scmp.ne.s32.totalorder %s189, %s203
      %p205 = scmp.eq.s32.totalorder %s38, 0
      %p206 = por %p204, %p205
      %s208 = sadd.s32 %s207, 1
      %p211 = scmp.eq.s32.totalorder %s32, 1
      %p212 = scmp.ne.s32.totalorder %s207, %s209
      %p213 = scmp.eq.s32.totalorder %s32, 0
      %p214 = por %p212, %p213
      %p215 = scmp.ne.s32.totalorder %s207, %s209
      %p216 = scmp.eq.s32.totalorder %s37, 1
      %p217 = por %p215, %p216
      %p218 = scmp.ne.s32.totalorder %s209, %s210
      %p219 = scmp.eq.s32.totalorder %s37, 0
      %p220 = por %p218, %p219
      %p221 = scmp.ne.s32.totalorder %s209, %s210
      %p222 = scmp.eq.s32.totalorder %s38, 1
      %p223 = por %p221, %p222
      %p225 = scmp.ne.s32.totalorder %s210, %s224
      %p226 = scmp.eq.s32.totalorder %s38, 0
      %p227 = por %p225, %p226
      %s229 = sadd.s32 %s228, 1
      %p232 = scmp.eq.s32.totalorder %s32, 1
      %p233 = scmp.ne.s32.totalorder %s228, %s230
      %p234 = scmp.eq.s32.totalorder %s32, 0
      %p235 = por %p233, %p234
      %p236 = scmp.ne.s32.totalorder %s228, %s230
      %p237 = scmp.eq.s32.totalorder %s37, 1
      %p238 = por %p236, %p237
      %p239 = scmp.ne.s32.totalorder %s230, %s231
      %p240 = scmp.eq.s32.totalorder %s37, 0
      %p241 = por %p239, %p240
      %p242 = scmp.ne.s32.totalorder %s230, %s231
      %p243 = scmp.eq.s32.totalorder %s38, 1
      %p244 = por %p242, %p243
      %p246 = scmp.ne.s32.totalorder %s231, %s245
      %p247 = scmp.eq.s32.totalorder %s38, 0
      %p248 = por %p246, %p247
      %s250 = sadd.s32 %s249, 1
      %p253 = scmp.eq.s32.totalorder %s32, 1
      %p254 = scmp.ne.s32.totalorder %s249, %s251
      %p255 = scmp.eq.s32.totalorder %s32, 0
      %p256 = por %p254, %p255
      %p257 = scmp.ne.s32.totalorder %s249, %s251
      %p258 = scmp.eq.s32.totalorder %s37, 1
      %p259 = por %p257, %p258
      %p260 = scmp.ne.s32.totalorder %s251, %s252
      %p261 = scmp.eq.s32.totalorder %s37, 0
      %p262 = por %p260, %p261
      %p263 = scmp.ne.s32.totalorder %s251, %s252
      %p264 = scmp.eq.s32.totalorder %s38, 1
      %p265 = por %p263, %p264
      %p267 = scmp.ne.s32.totalorder %s252, %s266
      %p268 = scmp.eq.s32.totalorder %s38, 0
      %p269 = por %p267, %p268
      %s271 = sadd.s32 %s270, 1
      %p274 = scmp.eq.s32.totalorder %s32, 1
      %p275 = scmp.ne.s32.totalorder %s270, %s272
      %p276 = scmp.eq.s32.totalorder %s32, 0
      %p277 = por %p275, %p276
      %p278 = scmp.ne.s32.totalorder %s270, %s272
      %p279 = scmp.eq.s32.totalorder %s37, 1
      %p280 = por %p278, %p279
      %p281 = scmp.ne.s32.totalorder %s272, %s273
      %p282 = scmp.eq.s32.totalorder %s37, 0
      %p283 = por %p281, %p282
      %p284 = scmp.ne.s32.totalorder %s272, %s273
      %p285 = scmp.eq.s32.totalorder %s38, 1
      %p286 = por %p284, %p285
      %p288 = scmp.ne.s32.totalorder %s273, %s287
      %p289 = scmp.eq.s32.totalorder %s38, 0
      %p290 = por %p288, %p289
      %s292 = sadd.s32 %s291, 1
      %p295 = scmp.eq.s32.totalorder %s32, 1
      %p296 = scmp.ne.s32.totalorder %s291, %s293
      %p297 = scmp.eq.s32.totalorder %s32, 0
      %p298 = por %p296, %p297
      %p299 = scmp.ne.s32.totalorder %s291, %s293
      %p300 = scmp.eq.s32.totalorder %s37, 1
      %p301 = por %p299, %p300
      %p302 = scmp.ne.s32.totalorder %s293, %s294
      %p303 = scmp.eq.s32.totalorder %s37, 0
      %p304 = por %p302, %p303
      %p305 = scmp.ne.s32.totalorder %s293, %s294
      %p306 = scmp.eq.s32.totalorder %s38, 1
      %p307 = por %p305, %p306
      %p309 = scmp.ne.s32.totalorder %s294, %s308
      %p310 = scmp.eq.s32.totalorder %s38, 0
      %p311 = por %p309, %p310
      %s313 = sadd.s32 %s312, 1
      %p316 = scmp.eq.s32.totalorder %s32, 1
      %p317 = scmp.ne.s32.totalorder %s312, %s314
      %p318 = scmp.eq.s32.totalorder %s32, 0
      %p319 = por %p317, %p318
      %p320 = scmp.ne.s32.totalorder %s312, %s314
      %p321 = scmp.eq.s32.totalorder %s37, 1
      %p322 = por %p320, %p321
      %p323 = scmp.ne.s32.totalorder %s314, %s315
      %p324 = scmp.eq.s32.totalorder %s37, 0
      %p325 = por %p323, %p324
      %p326 = scmp.ne.s32.totalorder %s314, %s315
      %p327 = scmp.eq.s32.totalorder %s38, 1
      %p328 = por %p326, %p327
      %p330 = scmp.ne.s32.totalorder %s315, %s329
      %p331 = scmp.eq.s32.totalorder %s38, 0
      %p332 = por %p330, %p331
      %s334 = sadd.s32 %s333, 1
      %p337 = scmp.eq.s32.totalorder %s32, 1
      %p338 = scmp.ne.s32.totalorder %s333, %s335
      %p339 = scmp.eq.s32.totalorder %s32, 0
      %p340 = por %p338, %p339
      %p341 = scmp.ne.s32.totalorder %s333, %s335
      %p342 = scmp.eq.s32.totalorder %s37, 1
      %p343 = por %p341, %p342
      %p344 = scmp.ne.s32.totalorder %s335, %s336
      %p345 = scmp.eq.s32.totalorder %s37, 0
      %p346 = por %p344, %p345
      %p347 = scmp.ne.s32.totalorder %s335, %s336
      %p348 = scmp.eq.s32.totalorder %s38, 1
      %p349 = por %p347, %p348
      %p351 = scmp.ne.s32.totalorder %s336, %s350
      %p352 = scmp.eq.s32.totalorder %s38, 0
      %p353 = por %p351, %p352
      %s355 = sadd.s32 %s354, 1
      %p358 = scmp.eq.s32.totalorder %s32, 1
      %p359 = scmp.ne.s32.totalorder %s354, %s356
      %p360 = scmp.eq.s32.totalorder %s32, 0
      %p361 = por %p359, %p360
      %p362 = scmp.ne.s32.totalorder %s354, %s356
      %p363 = scmp.eq.s32.totalorder %s37, 1
      %p364 = por %p362, %p363
      %p365 = scmp.ne.s32.totalorder %s356, %s357
      %p366 = scmp.eq.s32.totalorder %s37, 0
      %p367 = por %p365, %p366
      %p368 = scmp.ne.s32.totalorder %s356, %s357
      %p369 = scmp.eq.s32.totalorder %s38, 1
      %p370 = por %p368, %p369
      %p372 = scmp.ne.s32.totalorder %s357, %s371
      %p373 = scmp.eq.s32.totalorder %s38, 0
      %p374 = por %p372, %p373
      %s375 = ssub.s32 %s32, %s39
      %p376 = scmp.eq.s32.totalorder %s375, 0
      %s378 = sadd.s32 %s377, 1
      %s379 = scalar_select %p376, %s377, %s378
      %p382 = pneg %p376
      %p383 = scmp.eq.s32.totalorder %s32, 1
      %p384 = por %p382, %p383
      %p385 = scmp.ne.s32.totalorder %s377, %s380
      %p386 = scmp.eq.s32.totalorder %s32, 0
      %p387 = por %p385, %p386
      %p388 = scmp.ne.s32.totalorder %s377, %s380
      %p389 = scmp.eq.s32.totalorder %s37, 1
      %p390 = por %p388, %p389
      %p391 = scmp.ne.s32.totalorder %s380, %s381
      %p392 = scmp.eq.s32.totalorder %s37, 0
      %p393 = por %p391, %p392
      %p394 = scmp.ne.s32.totalorder %s380, %s381
      %p395 = scmp.eq.s32.totalorder %s38, 1
      %p396 = por %p394, %p395
      %p398 = scmp.ne.s32.totalorder %s381, %s397
      %p399 = scmp.eq.s32.totalorder %s38, 0
      %p400 = por %p398, %p399
      %s401 = ssub.s32 %s32, %s39
      %p402 = scmp.eq.s32.totalorder %s401, 0
      %s404 = sadd.s32 %s403, 1
      %s405 = scalar_select %p402, %s403, %s404
      %p408 = pneg %p402
      %p409 = scmp.eq.s32.totalorder %s32, 1
      %p410 = por %p408, %p409
      %p411 = scmp.ne.s32.totalorder %s403, %s406
      %p412 = scmp.eq.s32.totalorder %s32, 0
      %p413 = por %p411, %p412
      %p414 = scmp.ne.s32.totalorder %s403, %s406
      %p415 = scmp.eq.s32.totalorder %s37, 1
      %p416 = por %p414, %p415
      %p417 = scmp.ne.s32.totalorder %s406, %s407
      %p418 = scmp.eq.s32.totalorder %s37, 0
      %p419 = por %p417, %p418
      %p420 = scmp.ne.s32.totalorder %s406, %s407
      %p421 = scmp.eq.s32.totalorder %s38, 1
      %p422 = por %p420, %p421
      %p424 = scmp.ne.s32.totalorder %s407, %s423
      %p425 = scmp.eq.s32.totalorder %s38, 0
      %p426 = por %p424, %p425
      %s427 = ssub.s32 %s32, %s39
      %p428 = scmp.eq.s32.totalorder %s427, 0
      %s430 = sadd.s32 %s429, 1
      %s431 = scalar_select %p428, %s429, %s430
      %p434 = pneg %p428
      %p435 = scmp.eq.s32.totalorder %s32, 1
      %p436 = por %p434, %p435
      %p437 = scmp.ne.s32.totalorder %s429, %s432
      %p438 = scmp.eq.s32.totalorder %s32, 0
      %p439 = por %p437, %p438
      %p440 = scmp.ne.s32.totalorder %s429, %s432
      %p441 = scmp.eq.s32.totalorder %s37, 1
      %p442 = por %p440, %p441
      %p443 = scmp.ne.s32.totalorder %s432, %s433
      %p444 = scmp.eq.s32.totalorder %s37, 0
      %p445 = por %p443, %p444
      %p446 = scmp.ne.s32.totalorder %s432, %s433
      %p447 = scmp.eq.s32.totalorder %s38, 1
      %p448 = por %p446, %p447
      %p450 = scmp.ne.s32.totalorder %s433, %s449
      %p451 = scmp.eq.s32.totalorder %s38, 0
      %p452 = por %p450, %p451
      %p453 = scmp.le.s32.totalorder 1, %s32
      %p454 = scmp.lt.s32.totalorder %s32, 3
      %p455 = pnand %p453, %p454
      %p456 = pneg %p455
      // Predicated region
      $region9: #{tpu_custom_call.1} parent=5 // pred_check
        _
      $region10: #{tpu_custom_call.1} parent=5 // pred_check_branch
        %458 = sbr.rel (%p455) target = $region12
      $region11: #{tpu_custom_call.1} parent=5 // pred_region
        %s459 = ssub.s32 %s32, 1
        // Predicated region
        $region13: #{tpu_custom_call.1} parent=11 // pred_check
          %p460 = pneg %p157
        $region14: #{tpu_custom_call.1} parent=11 // pred_check_branch
          %462 = sbr.rel (%p460) target = $region16
        $region15: #{tpu_custom_call.1} parent=11 // pred_region
          _
        $region16: #{tpu_custom_call.1} parent=11 // pred_fallthru
          _
        // Predicated region
        $region17: #{tpu_custom_call.1} parent=11 // pred_check
          %p463 = pneg %p178
        $region18: #{tpu_custom_call.1} parent=11 // pred_check_branch
          %465 = sbr.rel (%p463) target = $region20
        $region19: #{tpu_custom_call.1} parent=11 // pred_region
          _
        $region20: #{tpu_custom_call.1} parent=11 // pred_fallthru
          _
        // Predicated region
        $region21: #{tpu_custom_call.1} parent=11 // pred_check
          %p466 = pneg %p199
        $region22: #{tpu_custom_call.1} parent=11 // pred_check_branch
          %468 = sbr.rel (%p466) target = $region24
        $region23: #{tpu_custom_call.1} parent=11 // pred_region
          %s470 = ssub.s32 256, 256
          %471 = vsyncadd [#allocation7], %s470
          %s472 = sshll.u32 [#allocation6], 4
          %s473 = int_to_ptr.vmem [resolvable:$true] %s472
          %478 = dma.hbm_to_vmem [thread:$0]  %s6, 256, %s473, [#allocation7], 128, 128, 8
        $region24: #{tpu_custom_call.1} parent=11 // pred_fallthru
          _
        // Predicated region
        $region25: #{tpu_custom_call.1} parent=11 // pred_check
          %p479 = pneg %p220
        $region26: #{tpu_custom_call.1} parent=11 // pred_check_branch
          %481 = sbr.rel (%p479) target = $region28
        $region27: #{tpu_custom_call.1} parent=11 // pred_region
          %s483 = ssub.s32 256, 256
          %484 = vsyncadd [#allocation10], %s483
          %s485 = sshll.u32 [#allocation9], 4
          %s486 = int_to_ptr.vmem [resolvable:$true] %s485
          %491 = dma.hbm_to_vmem [thread:$0]  %s7, 256, %s486, [#allocation10], 128, 128, 8
        $region28: #{tpu_custom_call.1} parent=11 // pred_fallthru
          _
        // Predicated region
        $region29: #{tpu_custom_call.1} parent=11 // pred_check
          %p492 = pneg %p241
        $region30: #{tpu_custom_call.1} parent=11 // pred_check_branch
          %494 = sbr.rel (%p492) target = $region32
        $region31: #{tpu_custom_call.1} parent=11 // pred_region
          _
        $region32: #{tpu_custom_call.1} parent=11 // pred_fallthru
          _
        // Predicated region
        $region33: #{tpu_custom_call.1} parent=11 // pred_check
          %p495 = pneg %p262
        $region34: #{tpu_custom_call.1} parent=11 // pred_check_branch
          %497 = sbr.rel (%p495) target = $region36
        $region35: #{tpu_custom_call.1} parent=11 // pred_region
          _
        $region36: #{tpu_custom_call.1} parent=11 // pred_fallthru
          _
        // Predicated region
        $region37: #{tpu_custom_call.1} parent=11 // pred_check
          %p498 = pneg %p283
        $region38: #{tpu_custom_call.1} parent=11 // pred_check_branch
          %500 = sbr.rel (%p498) target = $region40
        $region39: #{tpu_custom_call.1} parent=11 // pred_region
          _
        $region40: #{tpu_custom_call.1} parent=11 // pred_fallthru
          _
        // Predicated region
        $region41: #{tpu_custom_call.1} parent=11 // pred_check
          %p501 = pneg %p304
        $region42: #{tpu_custom_call.1} parent=11 // pred_check_branch
          %503 = sbr.rel (%p501) target = $region44
        $region43: #{tpu_custom_call.1} parent=11 // pred_region
          _
        $region44: #{tpu_custom_call.1} parent=11 // pred_fallthru
          _
        // Predicated region
        $region45: #{tpu_custom_call.1} parent=11 // pred_check
          %p504 = pneg %p325
        $region46: #{tpu_custom_call.1} parent=11 // pred_check_branch
          %506 = sbr.rel (%p504) target = $region48
        $region47: #{tpu_custom_call.1} parent=11 // pred_region
          _
        $region48: #{tpu_custom_call.1} parent=11 // pred_fallthru
          _
        // Predicated region
        $region49: #{tpu_custom_call.1} parent=11 // pred_check
          %p507 = pneg %p346
        $region50: #{tpu_custom_call.1} parent=11 // pred_check_branch
          %509 = sbr.rel (%p507) target = $region52
        $region51: #{tpu_custom_call.1} parent=11 // pred_region
          _
        $region52: #{tpu_custom_call.1} parent=11 // pred_fallthru
          _
        // Predicated region
        $region53: #{tpu_custom_call.1} parent=11 // pred_check
          %p510 = pneg %p367
        $region54: #{tpu_custom_call.1} parent=11 // pred_check_branch
          %512 = sbr.rel (%p510) target = $region56
        $region55: #{tpu_custom_call.1} parent=11 // pred_region
          _
        $region56: #{tpu_custom_call.1} parent=11 // pred_fallthru
          _
      $region12: #{tpu_custom_call.1} parent=5 // pred_fallthru
        _
      %p513 = scmp.lt.s32.totalorder %s32, 2
      // Predicated region
      $region57: #{tpu_custom_call.1} parent=5 // pred_check
        %p514 = pneg %p513
      $region58: #{tpu_custom_call.1} parent=5 // pred_check_branch
        %516 = sbr.rel (%p514) target = $region60
      $region59: #{tpu_custom_call.1} parent=5 // pred_region
        // Predicated region
        $region61: #{tpu_custom_call.1} parent=59 // pred_check
          %p517 = pneg %p52
        $region62: #{tpu_custom_call.1} parent=59 // pred_check_branch
          %519 = sbr.rel (%p517) target = $region64
        $region63: #{tpu_custom_call.1} parent=59 // pred_region
          %s520 = sand.u32 %s42, 1
          %s521 = sand.u32 %s42, 1
          %s522 = smul.addr %s521, 16
          %s523 = scalar_lea.vmem [#allocation2], %s522
          %s524 = smul.addr %s32, 8
          %s525 = scalar_lea.vmem %s0, %s524
          // Predicated region
          $region65: #{tpu_custom_call.1} parent=63 // pred_check
            _
          $region66: #{tpu_custom_call.1} parent=63 // pred_check_branch
            %527 = sbr.rel (0) target = $region68
          $region67: #{tpu_custom_call.1} parent=63 // pred_region
            // Predicated region
            $region69: #{tpu_custom_call.1} parent=67 // pred_check
              _
            $region70: #{tpu_custom_call.1} parent=67 // pred_check_branch
              %529 = sbr.rel (0) target = $region72
            $region71: #{tpu_custom_call.1} parent=67 // pred_region
              // Predicated region
              $region84: #{tpu_custom_call.1} parent=71 // pred_check
                _
              $region85: #{tpu_custom_call.1} parent=71 // pred_check_branch
                %546 = sbr.rel (0) target = $region87
              $region86: #{tpu_custom_call.1} parent=71 // pred_region
                loop: start=0, step=1, limit=1
                $region88: #{tpu_custom_call.1} parent=86 // loop_pre_header
                  _
                $region89: #{tpu_custom_call.1} parent=86 // loop_header
                  %s548 = sphi 0, %s552
                  %p549 = scmp.ge.s32.totalorder %s548, 1
                  %s553 = sphi %s525, %s525
                  %s554 = sphi %s523, %s523
                $region90: #{tpu_custom_call.1} parent=86 // loop_header_branch
                  %551 = sbr.rel (%p549) target = $region94
                $region91: #{tpu_custom_call.1} parent=86 // loop_body
                  %v555 = vld [vmem:[%s553] sm:$0xff]
                  %556 = vst [vmem:[%s554] sm:$0xff] %v555
                  %v557 = vld [vmem:[%s553 + $0x10] sm:$0xff]
                  %558 = vst [vmem:[%s554 + $0x8] sm:$0xff] %v557
                $region92: #{tpu_custom_call.1} parent=86 // loop_footer
                  %s552 = sadd.s32 1, %s548
                $region93: #{tpu_custom_call.1} parent=86 // loop_footer_branch
                  %547 = sbr.rel target = $region89
                $region94: #{tpu_custom_call.1} parent=86 // loop_exit
                  _
              $region87: #{tpu_custom_call.1} parent=71 // pred_fallthru
                _
              // Predicated region
              $region95: #{tpu_custom_call.1} parent=71 // pred_check
                _
              $region96: #{tpu_custom_call.1} parent=71 // pred_check_branch
                %560 = sbr.rel target = $region98
              $region97: #{tpu_custom_call.1} parent=71 // pred_region
                _
              $region98: #{tpu_custom_call.1} parent=71 // pred_fallthru
                _
            $region72: #{tpu_custom_call.1} parent=67 // pred_fallthru
              _
            // Predicated region
            $region73: #{tpu_custom_call.1} parent=67 // pred_check
              _
            $region74: #{tpu_custom_call.1} parent=67 // pred_check_branch
              %531 = sbr.rel target = $region76
            $region75: #{tpu_custom_call.1} parent=67 // pred_region
              loop: start=0, step=1, limit=1
              $region77: #{tpu_custom_call.1} parent=75 // loop_pre_header
                _
              $region78: #{tpu_custom_call.1} parent=75 // loop_header
                %s534 = sphi 0, %s538
                %p535 = scmp.ge.s32.totalorder %s534, 1
                %s539 = sphi %s525, %s525
                %s540 = sphi %s523, %s523
              $region79: #{tpu_custom_call.1} parent=75 // loop_header_branch
                %537 = sbr.rel (%p535) target = $region83
              $region80: #{tpu_custom_call.1} parent=75 // loop_body
                %v541 = vld [vmem:[%s539] sm:$0xff]
                %542 = vst [vmem:[%s540] sm:$0xff] %v541
                %v543 = vld [vmem:[%s539 + $0x10] sm:$0xff]
                %544 = vst [vmem:[%s540 + $0x8] sm:$0xff] %v543
              $region81: #{tpu_custom_call.1} parent=75 // loop_footer
                %s538 = sadd.s32 1, %s534
              $region82: #{tpu_custom_call.1} parent=75 // loop_footer_branch
                %533 = sbr.rel target = $region78
              $region83: #{tpu_custom_call.1} parent=75 // loop_exit
                _
            $region76: #{tpu_custom_call.1} parent=67 // pred_fallthru
              _
          $region68: #{tpu_custom_call.1} parent=63 // pred_fallthru
            _
          %561 = vnop
        $region64: #{tpu_custom_call.1} parent=59 // pred_fallthru
          _
        // Predicated region
        $region99: #{tpu_custom_call.1} parent=59 // pred_check
          %p562 = pneg %p78
        $region100: #{tpu_custom_call.1} parent=59 // pred_check_branch
          %564 = sbr.rel (%p562) target = $region102
        $region101: #{tpu_custom_call.1} parent=59 // pred_region
          %s565 = sand.u32 %s68, 1
          %s566 = sand.u32 %s68, 1
          %s567 = smul.addr %s566, 16
          %s568 = scalar_lea.vmem [#allocation3], %s567
          %s569 = smul.addr %s32, 8
          %s570 = scalar_lea.vmem %s1, %s569
          // Predicated region
          $region103: #{tpu_custom_call.1} parent=101 // pred_check
            _
          $region104: #{tpu_custom_call.1} parent=101 // pred_check_branch
            %572 = sbr.rel (0) target = $region106
          $region105: #{tpu_custom_call.1} parent=101 // pred_region
            // Predicated region
            $region107: #{tpu_custom_call.1} parent=105 // pred_check
              _
            $region108: #{tpu_custom_call.1} parent=105 // pred_check_branch
              %574 = sbr.rel (0) target = $region110
            $region109: #{tpu_custom_call.1} parent=105 // pred_region
              // Predicated region
              $region122: #{tpu_custom_call.1} parent=109 // pred_check
                _
              $region123: #{tpu_custom_call.1} parent=109 // pred_check_branch
                %591 = sbr.rel (0) target = $region125
              $region124: #{tpu_custom_call.1} parent=109 // pred_region
                loop: start=0, step=1, limit=1
                $region126: #{tpu_custom_call.1} parent=124 // loop_pre_header
                  _
                $region127: #{tpu_custom_call.1} parent=124 // loop_header
                  %s593 = sphi 0, %s597
                  %p594 = scmp.ge.s32.totalorder %s593, 1
                  %s598 = sphi %s570, %s570
                  %s599 = sphi %s568, %s568
                $region128: #{tpu_custom_call.1} parent=124 // loop_header_branch
                  %596 = sbr.rel (%p594) target = $region132
                $region129: #{tpu_custom_call.1} parent=124 // loop_body
                  %v600 = vld [vmem:[%s598] sm:$0xff]
                  %601 = vst [vmem:[%s599] sm:$0xff] %v600
                  %v602 = vld [vmem:[%s598 + $0x10] sm:$0xff]
                  %603 = vst [vmem:[%s599 + $0x8] sm:$0xff] %v602
                $region130: #{tpu_custom_call.1} parent=124 // loop_footer
                  %s597 = sadd.s32 1, %s593
                $region131: #{tpu_custom_call.1} parent=124 // loop_footer_branch
                  %592 = sbr.rel target = $region127
                $region132: #{tpu_custom_call.1} parent=124 // loop_exit
                  _
              $region125: #{tpu_custom_call.1} parent=109 // pred_fallthru
                _
              // Predicated region
              $region133: #{tpu_custom_call.1} parent=109 // pred_check
                _
              $region134: #{tpu_custom_call.1} parent=109 // pred_check_branch
                %605 = sbr.rel target = $region136
              $region135: #{tpu_custom_call.1} parent=109 // pred_region
                _
              $region136: #{tpu_custom_call.1} parent=109 // pred_fallthru
                _
            $region110: #{tpu_custom_call.1} parent=105 // pred_fallthru
              _
            // Predicated region
            $region111: #{tpu_custom_call.1} parent=105 // pred_check
              _
            $region112: #{tpu_custom_call.1} parent=105 // pred_check_branch
              %576 = sbr.rel target = $region114
            $region113: #{tpu_custom_call.1} parent=105 // pred_region
              loop: start=0, step=1, limit=1
              $region115: #{tpu_custom_call.1} parent=113 // loop_pre_header
                _
              $region116: #{tpu_custom_call.1} parent=113 // loop_header
                %s579 = sphi 0, %s583
                %p580 = scmp.ge.s32.totalorder %s579, 1
                %s584 = sphi %s570, %s570
                %s585 = sphi %s568, %s568
              $region117: #{tpu_custom_call.1} parent=113 // loop_header_branch
                %582 = sbr.rel (%p580) target = $region121
              $region118: #{tpu_custom_call.1} parent=113 // loop_body
                %v586 = vld [vmem:[%s584] sm:$0xff]
                %587 = vst [vmem:[%s585] sm:$0xff] %v586
                %v588 = vld [vmem:[%s584 + $0x10] sm:$0xff]
                %589 = vst [vmem:[%s585 + $0x8] sm:$0xff] %v588
              $region119: #{tpu_custom_call.1} parent=113 // loop_footer
                %s583 = sadd.s32 1, %s579
              $region120: #{tpu_custom_call.1} parent=113 // loop_footer_branch
                %578 = sbr.rel target = $region116
              $region121: #{tpu_custom_call.1} parent=113 // loop_exit
                _
            $region114: #{tpu_custom_call.1} parent=105 // pred_fallthru
              _
          $region106: #{tpu_custom_call.1} parent=101 // pred_fallthru
            _
          %606 = vnop
        $region102: #{tpu_custom_call.1} parent=59 // pred_fallthru
          _
        // Predicated region
        $region137: #{tpu_custom_call.1} parent=59 // pred_check
          %p607 = pneg %p104
        $region138: #{tpu_custom_call.1} parent=59 // pred_check_branch
          %609 = sbr.rel (%p607) target = $region140
        $region139: #{tpu_custom_call.1} parent=59 // pred_region
          %s610 = sand.u32 %s94, 1
          %s611 = sand.u32 %s94, 1
          %s612 = smul.addr %s611, 16
          %s613 = scalar_lea.vmem [#allocation4], %s612
          %s614 = smul.addr %s32, 8
          %s615 = scalar_lea.vmem %s2, %s614
          // Predicated region
          $region141: #{tpu_custom_call.1} parent=139 // pred_check
            _
          $region142: #{tpu_custom_call.1} parent=139 // pred_check_branch
            %617 = sbr.rel (0) target = $region144
          $region143: #{tpu_custom_call.1} parent=139 // pred_region
            // Predicated region
            $region145: #{tpu_custom_call.1} parent=143 // pred_check
              _
            $region146: #{tpu_custom_call.1} parent=143 // pred_check_branch
              %619 = sbr.rel (0) target = $region148
            $region147: #{tpu_custom_call.1} parent=143 // pred_region
              // Predicated region
              $region160: #{tpu_custom_call.1} parent=147 // pred_check
                _
              $region161: #{tpu_custom_call.1} parent=147 // pred_check_branch
                %636 = sbr.rel (0) target = $region163
              $region162: #{tpu_custom_call.1} parent=147 // pred_region
                loop: start=0, step=1, limit=1
                $region164: #{tpu_custom_call.1} parent=162 // loop_pre_header
                  _
                $region165: #{tpu_custom_call.1} parent=162 // loop_header
                  %s638 = sphi 0, %s642
                  %p639 = scmp.ge.s32.totalorder %s638, 1
                  %s643 = sphi %s615, %s615
                  %s644 = sphi %s613, %s613
                $region166: #{tpu_custom_call.1} parent=162 // loop_header_branch
                  %641 = sbr.rel (%p639) target = $region170
                $region167: #{tpu_custom_call.1} parent=162 // loop_body
                  %v645 = vld [vmem:[%s643] sm:$0xff]
                  %646 = vst [vmem:[%s644] sm:$0xff] %v645
                  %v647 = vld [vmem:[%s643 + $0x10] sm:$0xff]
                  %648 = vst [vmem:[%s644 + $0x8] sm:$0xff] %v647
                $region168: #{tpu_custom_call.1} parent=162 // loop_footer
                  %s642 = sadd.s32 1, %s638
                $region169: #{tpu_custom_call.1} parent=162 // loop_footer_branch
                  %637 = sbr.rel target = $region165
                $region170: #{tpu_custom_call.1} parent=162 // loop_exit
                  _
              $region163: #{tpu_custom_call.1} parent=147 // pred_fallthru
                _
              // Predicated region
              $region171: #{tpu_custom_call.1} parent=147 // pred_check
                _
              $region172: #{tpu_custom_call.1} parent=147 // pred_check_branch
                %650 = sbr.rel target = $region174
              $region173: #{tpu_custom_call.1} parent=147 // pred_region
                _
              $region174: #{tpu_custom_call.1} parent=147 // pred_fallthru
                _
            $region148: #{tpu_custom_call.1} parent=143 // pred_fallthru
              _
            // Predicated region
            $region149: #{tpu_custom_call.1} parent=143 // pred_check
              _
            $region150: #{tpu_custom_call.1} parent=143 // pred_check_branch
              %621 = sbr.rel target = $region152
            $region151: #{tpu_custom_call.1} parent=143 // pred_region
              loop: start=0, step=1, limit=1
              $region153: #{tpu_custom_call.1} parent=151 // loop_pre_header
                _
              $region154: #{tpu_custom_call.1} parent=151 // loop_header
                %s624 = sphi 0, %s628
                %p625 = scmp.ge.s32.totalorder %s624, 1
                %s629 = sphi %s615, %s615
                %s630 = sphi %s613, %s613
              $region155: #{tpu_custom_call.1} parent=151 // loop_header_branch
                %627 = sbr.rel (%p625) target = $region159
              $region156: #{tpu_custom_call.1} parent=151 // loop_body
                %v631 = vld [vmem:[%s629] sm:$0xff]
                %632 = vst [vmem:[%s630] sm:$0xff] %v631
                %v633 = vld [vmem:[%s629 + $0x10] sm:$0xff]
                %634 = vst [vmem:[%s630 + $0x8] sm:$0xff] %v633
              $region157: #{tpu_custom_call.1} parent=151 // loop_footer
                %s628 = sadd.s32 1, %s624
              $region158: #{tpu_custom_call.1} parent=151 // loop_footer_branch
                %623 = sbr.rel target = $region154
              $region159: #{tpu_custom_call.1} parent=151 // loop_exit
                _
            $region152: #{tpu_custom_call.1} parent=143 // pred_fallthru
              _
          $region144: #{tpu_custom_call.1} parent=139 // pred_fallthru
            _
          %651 = vnop
        $region140: #{tpu_custom_call.1} parent=59 // pred_fallthru
          _
        // Predicated region
        $region175: #{tpu_custom_call.1} parent=59 // pred_check
          %p652 = pneg %p130
        $region176: #{tpu_custom_call.1} parent=59 // pred_check_branch
          %654 = sbr.rel (%p652) target = $region178
        $region177: #{tpu_custom_call.1} parent=59 // pred_region
          %s655 = sand.u32 %s120, 1
          %s656 = sand.u32 %s120, 1
          %s657 = smul.addr %s656, 16
          %s658 = scalar_lea.vmem [#allocation5], %s657
          %s659 = smul.addr %s32, 8
          %s660 = scalar_lea.vmem %s3, %s659
          // Predicated region
          $region179: #{tpu_custom_call.1} parent=177 // pred_check
            _
          $region180: #{tpu_custom_call.1} parent=177 // pred_check_branch
            %662 = sbr.rel (0) target = $region182
          $region181: #{tpu_custom_call.1} parent=177 // pred_region
            // Predicated region
            $region183: #{tpu_custom_call.1} parent=181 // pred_check
              _
            $region184: #{tpu_custom_call.1} parent=181 // pred_check_branch
              %664 = sbr.rel (0) target = $region186
            $region185: #{tpu_custom_call.1} parent=181 // pred_region
              // Predicated region
              $region198: #{tpu_custom_call.1} parent=185 // pred_check
                _
              $region199: #{tpu_custom_call.1} parent=185 // pred_check_branch
                %681 = sbr.rel (0) target = $region201
              $region200: #{tpu_custom_call.1} parent=185 // pred_region
                loop: start=0, step=1, limit=1
                $region202: #{tpu_custom_call.1} parent=200 // loop_pre_header
                  _
                $region203: #{tpu_custom_call.1} parent=200 // loop_header
                  %s683 = sphi 0, %s687
                  %p684 = scmp.ge.s32.totalorder %s683, 1
                  %s688 = sphi %s660, %s660
                  %s689 = sphi %s658, %s658
                $region204: #{tpu_custom_call.1} parent=200 // loop_header_branch
                  %686 = sbr.rel (%p684) target = $region208
                $region205: #{tpu_custom_call.1} parent=200 // loop_body
                  %v690 = vld [vmem:[%s688] sm:$0xff]
                  %691 = vst [vmem:[%s689] sm:$0xff] %v690
                  %v692 = vld [vmem:[%s688 + $0x10] sm:$0xff]
                  %693 = vst [vmem:[%s689 + $0x8] sm:$0xff] %v692
                $region206: #{tpu_custom_call.1} parent=200 // loop_footer
                  %s687 = sadd.s32 1, %s683
                $region207: #{tpu_custom_call.1} parent=200 // loop_footer_branch
                  %682 = sbr.rel target = $region203
                $region208: #{tpu_custom_call.1} parent=200 // loop_exit
                  _
              $region201: #{tpu_custom_call.1} parent=185 // pred_fallthru
                _
              // Predicated region
              $region209: #{tpu_custom_call.1} parent=185 // pred_check
                _
              $region210: #{tpu_custom_call.1} parent=185 // pred_check_branch
                %695 = sbr.rel target = $region212
              $region211: #{tpu_custom_call.1} parent=185 // pred_region
                _
              $region212: #{tpu_custom_call.1} parent=185 // pred_fallthru
                _
            $region186: #{tpu_custom_call.1} parent=181 // pred_fallthru
              _
            // Predicated region
            $region187: #{tpu_custom_call.1} parent=181 // pred_check
              _
            $region188: #{tpu_custom_call.1} parent=181 // pred_check_branch
              %666 = sbr.rel target = $region190
            $region189: #{tpu_custom_call.1} parent=181 // pred_region
              loop: start=0, step=1, limit=1
              $region191: #{tpu_custom_call.1} parent=189 // loop_pre_header
                _
              $region192: #{tpu_custom_call.1} parent=189 // loop_header
                %s669 = sphi 0, %s673
                %p670 = scmp.ge.s32.totalorder %s669, 1
                %s674 = sphi %s660, %s660
                %s675 = sphi %s658, %s658
              $region193: #{tpu_custom_call.1} parent=189 // loop_header_branch
                %672 = sbr.rel (%p670) target = $region197
              $region194: #{tpu_custom_call.1} parent=189 // loop_body
                %v676 = vld [vmem:[%s674] sm:$0xff]
                %677 = vst [vmem:[%s675] sm:$0xff] %v676
                %v678 = vld [vmem:[%s674 + $0x10] sm:$0xff]
                %679 = vst [vmem:[%s675 + $0x8] sm:$0xff] %v678
              $region195: #{tpu_custom_call.1} parent=189 // loop_footer
                %s673 = sadd.s32 1, %s669
              $region196: #{tpu_custom_call.1} parent=189 // loop_footer_branch
                %668 = sbr.rel target = $region192
              $region197: #{tpu_custom_call.1} parent=189 // loop_exit
                _
            $region190: #{tpu_custom_call.1} parent=181 // pred_fallthru
              _
          $region182: #{tpu_custom_call.1} parent=177 // pred_fallthru
            _
          %696 = vnop
        $region178: #{tpu_custom_call.1} parent=59 // pred_fallthru
          _
      $region60: #{tpu_custom_call.1} parent=5 // pred_fallthru
        _
      %p697 = scmp.le.s32.totalorder 1, %s32
      %p698 = scmp.lt.s32.totalorder %s32, 3
      %p699 = pnand %p697, %p698
      %p700 = pneg %p699
      // Predicated region
      $region213: #{tpu_custom_call.1} parent=5 // pred_check
        _
      $region214: #{tpu_custom_call.1} parent=5 // pred_check_branch
        %702 = sbr.rel (%p699) target = $region216
      $region215: #{tpu_custom_call.1} parent=5 // pred_region
        %s703 = ssub.s32 %s32, 1
        %s704 = sand.u32 %s45, 1
        %s705 = sand.u32 %s45, 1
        %s706 = smul.addr %s705, 16
        %s707 = scalar_lea.vmem [#allocation2], %s706
        // Predicated region
        $region217: #{tpu_custom_call.1} parent=215 // pred_check
          %p708 = pneg %p58
        $region218: #{tpu_custom_call.1} parent=215 // pred_check_branch
          %710 = sbr.rel (%p708) target = $region220
        $region219: #{tpu_custom_call.1} parent=215 // pred_region
          _
        $region220: #{tpu_custom_call.1} parent=215 // pred_fallthru
          _
        %s711 = sand.u32 %s71, 1
        %s712 = sand.u32 %s71, 1
        %s713 = smul.addr %s712, 16
        %s714 = scalar_lea.vmem [#allocation3], %s713
        // Predicated region
        $region221: #{tpu_custom_call.1} parent=215 // pred_check
          %p715 = pneg %p84
        $region222: #{tpu_custom_call.1} parent=215 // pred_check_branch
          %717 = sbr.rel (%p715) target = $region224
        $region223: #{tpu_custom_call.1} parent=215 // pred_region
          _
        $region224: #{tpu_custom_call.1} parent=215 // pred_fallthru
          _
        %s718 = sand.u32 %s97, 1
        %s719 = sand.u32 %s97, 1
        %s720 = smul.addr %s719, 16
        %s721 = scalar_lea.vmem [#allocation4], %s720
        // Predicated region
        $region225: #{tpu_custom_call.1} parent=215 // pred_check
          %p722 = pneg %p110
        $region226: #{tpu_custom_call.1} parent=215 // pred_check_branch
          %724 = sbr.rel (%p722) target = $region228
        $region227: #{tpu_custom_call.1} parent=215 // pred_region
          _
        $region228: #{tpu_custom_call.1} parent=215 // pred_fallthru
          _
        %s725 = sand.u32 %s123, 1
        %s726 = sand.u32 %s123, 1
        %s727 = smul.addr %s726, 16
        %s728 = scalar_lea.vmem [#allocation5], %s727
        // Predicated region
        $region229: #{tpu_custom_call.1} parent=215 // pred_check
          %p729 = pneg %p136
        $region230: #{tpu_custom_call.1} parent=215 // pred_check_branch
          %731 = sbr.rel (%p729) target = $region232
        $region231: #{tpu_custom_call.1} parent=215 // pred_region
          _
        $region232: #{tpu_custom_call.1} parent=215 // pred_fallthru
          _
        // Predicated region
        $region233: #{tpu_custom_call.1} parent=215 // pred_check
          %p732 = pneg %p199
        $region234: #{tpu_custom_call.1} parent=215 // pred_check_branch
          %734 = sbr.rel (%p732) target = $region236
        $region235: #{tpu_custom_call.1} parent=215 // pred_region
          %735 = dma.done [#allocation7], 256
        $region236: #{tpu_custom_call.1} parent=215 // pred_fallthru
          _
        // Predicated region
        $region237: #{tpu_custom_call.1} parent=215 // pred_check
          %p736 = pneg %p220
        $region238: #{tpu_custom_call.1} parent=215 // pred_check_branch
          %738 = sbr.rel (%p736) target = $region240
        $region239: #{tpu_custom_call.1} parent=215 // pred_region
          %739 = dma.done [#allocation10], 256
        $region240: #{tpu_custom_call.1} parent=215 // pred_fallthru
          _
        %s740 = sand.u32 %s45, 1
        %s741 = sand.u32 %s45, 1
        %s742 = smul.addr %s741, 16
        %s743 = scalar_lea.vmem [#allocation2], %s742
        %p744 = pneg %p58
        %p745 = pneg %p55
        %s746 = sand.u32 %s71, 1
        %s747 = sand.u32 %s71, 1
        %s748 = smul.addr %s747, 16
        %s749 = scalar_lea.vmem [#allocation3], %s748
        %p750 = pneg %p84
        %p751 = pneg %p81
        %s752 = sand.u32 %s97, 1
        %s753 = sand.u32 %s97, 1
        %s754 = smul.addr %s753, 16
        %s755 = scalar_lea.vmem [#allocation4], %s754
        %p756 = pneg %p110
        %p757 = pneg %p107
        %s758 = sand.u32 %s123, 1
        %s759 = sand.u32 %s123, 1
        %s760 = smul.addr %s759, 16
        %s761 = scalar_lea.vmem [#allocation5], %s760
        %p762 = pneg %p136
        %p763 = pneg %p133
        %p764 = pneg %p157
        %p765 = pneg %p154
        %p766 = pneg %p178
        %p767 = pneg %p175
        %p768 = pneg %p199
        %p769 = pneg %p196
        %p770 = pneg %p220
        %p771 = pneg %p217
        %p772 = pneg %p241
        %p773 = pneg %p238
        %p774 = pneg %p262
        %p775 = pneg %p259
        %p776 = pneg %p283
        %p777 = pneg %p280
        %p778 = pneg %p304
        %p779 = pneg %p301
        %p780 = pneg %p325
        %p781 = pneg %p322
        %p782 = pneg %p346
        %p783 = pneg %p343
        %p784 = pneg %p367
        %p785 = pneg %p364
        %p786 = pneg %p393
        %p787 = pneg %p390
        %s788 = sand.u32 %s380, 1
        %s789 = scalar_lea.sflag [#allocation8], %s788
        %s790 = sand.u32 %s380, 1
        %s791 = smul.addr %s790, 16
        %s792 = scalar_lea.vmem [#allocation11], %s791
        %p793 = pneg %p419
        %p794 = pneg %p416
        %s795 = sand.u32 %s37, 1
        %s796 = scalar_lea.sflag [#allocation13], %s795
        %s797 = sand.u32 %s406, 1
        %s798 = smul.addr %s797, 16
        %s799 = scalar_lea.vmem [#allocation12], %s798
        %p800 = pneg %p445
        %p801 = pneg %p442
        %s802 = sand.u32 %s37, 1
        %s803 = scalar_lea.sflag [#allocation13], %s802
        %s804 = sand.u32 %s432, 1
        %s805 = smul.addr %s804, 16
        %s806 = scalar_lea.vmem [#allocation14], %s805
        %v807 = vld [vmem:[%s707] sm:$0xff]
        %v808 = vld [vmem:[%s707 + $0x8] sm:$0xff]
        %v809 = vld [vmem:[%s714] sm:$0xff]
        %v810 = vld [vmem:[%s714 + $0x8] sm:$0xff]
        %v811 = vld [vmem:[%s721] sm:$0xff]
        %v812 = vld [vmem:[%s721 + $0x8] sm:$0xff]
        %v813 = vld [vmem:[%s728] sm:$0xff]
        %v814 = vld [vmem:[%s728 + $0x8] sm:$0xff]
        %v815 = vlaneseq
        %v816 = vand.u32 %v815, 127
        %vm817 = vcmp.lt.s32.totalorder %v816, 0
        %v818 = vsub.s32 0, %v816
        %v819 = vsel %vm817, %v818, %v816
        %v820 = vshrl.u32 %v819, 7
        %v821 = vand.u32 %v819, 127
        %v822 = vsub.s32 0, %v821
        %v823 = vsel %vm817, %v822, %v821
        %vm824 = vcmp.ne.s32.totalorder %v823, 0
        %vm825 = vcmp.lt.s32.totalorder %v823, 0
        %vm826 = vmand %vm825, %vm824
        %v827 = vadd.s32 %v823, 128
        %v828 = vsel %vm826, %v827, %v823
        %vm829 = vcmp.ne.s32.totalorder %v828, 0
        %v830 = vld [vmem:[%s4] sm:$0xff]
        %v831 = vld [vmem:[%s4 + $0x8] sm:$0xff]
        %vm832 = vcmask 130048
        %v834 = vsel %vm832, %v830, 0
        %v837 = vsel %vm832, %v831, 0
        %839 = vmatprep.subr.mxu0 0.0
        %840 = vmatpush1.msra.mxu0 %v807
        %841 = vmatprep.subr.mxu0 0.0
        %842 = vmatpush1.msra.mxu0 %v808
        %843 = vmatprep.subr.mxu0 0.0
        %844 = vmatpush1.msra.mxu0 0.0
        %845 = vmatprep.subr.mxu0 0.0
        %846 = vmatpush1.msra.mxu0 0.0
        %847 = vmatprep.subr.mxu0 0.0
        %848 = vmatpush1.msra.mxu0 0.0
        %849 = vmatprep.subr.mxu0 0.0
        %850 = vmatpush1.msra.mxu0 0.0
        %851 = vmatprep.subr.mxu0 0.0
        %852 = vmatpush1.msra.mxu0 0.0
        %853 = vmatprep.subr.mxu0 0.0
        %854 = vmatpush1.msra.mxu0 0.0
        %855 = vmatprep.subr.mxu0 0.0
        %856 = vmatpush1.msra.mxu0 0.0
        %857 = vmatprep.subr.mxu0 0.0
        %858 = vmatpush1.msra.mxu0 0.0
        %859 = vmatprep.subr.mxu0 0.0
        %860 = vmatpush1.msra.mxu0 0.0
        %861 = vmatprep.subr.mxu0 0.0
        %862 = vmatpush1.msra.mxu0 0.0
        %863 = vmatprep.subr.mxu0 0.0
        %864 = vmatpush1.msra.mxu0 0.0
        %865 = vmatprep.subr.mxu0 0.0
        %866 = vmatpush1.msra.mxu0 0.0
        %867 = vmatprep.subr.mxu0 0.0
        %868 = vmatpush1.msra.mxu0 0.0
        %869 = vmatprep.subr.mxu0 0.0
        %870 = vmatpush1.msra.mxu0 0.0
        %871 = vmatprep.subr.mxu0 0.0
        %872 = vmatpush1.msra.mxu0 0.0
        %873 = vmatprep.subr.mxu0 0.0
        %874 = vmatpush1.msra.mxu0 0.0
        %875 = vmatprep.subr.mxu0 0.0
        %876 = vmatpush1.msra.mxu0 0.0
        %877 = vmatprep.subr.mxu0 0.0
        %878 = vmatpush1.msra.mxu0 0.0
        %879 = vmatprep.subr.mxu0 0.0
        %880 = vmatpush1.msra.mxu0 0.0
        %881 = vmatprep.subr.mxu0 0.0
        %882 = vmatpush1.msra.mxu0 0.0
        %883 = vmatprep.subr.mxu0 0.0
        %884 = vmatpush1.msra.mxu0 0.0
        %885 = vmatprep.subr.mxu0 0.0
        %886 = vmatpush1.msra.mxu0 0.0
        %887 = vmatprep.subr.mxu0 0.0
        %888 = vmatpush1.msra.mxu0 0.0
        %889 = vmatprep.subr.mxu0 0.0
        %890 = vmatpush1.msra.mxu0 0.0
        %891 = vmatprep.subr.mxu0 0.0
        %892 = vmatpush1.msra.mxu0 0.0
        %893 = vmatprep.subr.mxu0 0.0
        %894 = vmatpush1.msra.mxu0 0.0
        %895 = vmatprep.subr.mxu0 0.0
        %896 = vmatpush1.msra.mxu0 0.0
        %897 = vmatprep.subr.mxu0 0.0
        %898 = vmatpush1.msra.mxu0 0.0
        %899 = vmatprep.subr.mxu0 0.0
        %900 = vmatpush1.msra.mxu0 0.0
        %901 = vmatprep.subr.mxu0 0.0
        %902 = vmatpush1.msra.mxu0 0.0
        %903 = vmatprep.mubr.f32.mxu0 0.0
        %904 = vmatmul.mubr.f32.gmra.mrb[0].mxu0 %v834
        %v905 = vpop.f32.mrb[0].mxu0
        %v906 = vadd.f32 0.0, %v905
        %v907 = vpop.f32.mrb[0].mxu0
        %908 = vmatprep.mubr.f32.mxu0 0.0
        %909 = vmatmul.mubr.f32.gmra.mrb[0].mxu0 %v837
        %v910 = vpop.f32.mrb[0].mxu0
        %v911 = vadd.f32 0.0, %v910
        %v912 = vpop.f32.mrb[0].mxu0
        %913 = vdwg.mxu0
        %v914 = vadd.f32 %v807, %v906
        %v915 = vadd.f32 %v808, %v911
        %v916 = vld [vmem:[%s5] sm:$0xff]
        %v917 = vld [vmem:[%s5 + $0x8] sm:$0xff]
        %919 = vset.pattern.permute.xlu0 0
        %920 = vperm.xlu0 %919, %v916
        %v921 = vpop.permute.xlu0 %920
        %924 = vset.pattern.permute.xlu0 0
        %925 = vperm.xlu0 %924, %v917
        %v926 = vpop.permute.xlu0 %925
        %v928 = vadd.f32 %v914, %v921
        %v929 = vadd.f32 %v915, %v926
        %v930 = vld [vmem:[%s11] sm:$0xff]
        %v931 = vld [vmem:[%s11 + $0x8] sm:$0xff]
        %v932 = vld [vmem:[%s11 + $0x10] sm:$0xff]
        %v933 = vld [vmem:[%s11 + $0x18] sm:$0xff]
        %v934 = vld [vmem:[%s12] sm:$0xff]
        %v935 = vld [vmem:[%s12 + $0x8] sm:$0xff]
        %v936 = vld [vmem:[%s12 + $0x10] sm:$0xff]
        %v937 = vld [vmem:[%s12 + $0x18] sm:$0xff]
        %939 = vset.pattern.permute.xlu0 0
        %940 = vperm.xlu0 %939, %v934
        %v941 = vpop.permute.xlu0 %940
        %944 = vset.pattern.permute.xlu0 0
        %945 = vperm.xlu0 %944, %v935
        %v946 = vpop.permute.xlu0 %945
        %949 = vset.pattern.permute.xlu0 0
        %950 = vperm.xlu0 %949, %v936
        %v951 = vpop.permute.xlu0 %950
        %954 = vset.pattern.permute.xlu0 0
        %955 = vperm.xlu0 %954, %v937
        %v956 = vpop.permute.xlu0 %955
        %v959 = vsel %vm832, %v930, 0
        %v962 = vsel %vm832, %v931, 0
        %v965 = vsel %vm832, %v932, 0
        %v968 = vsel %vm832, %v933, 0
        %970 = vmatprep.subr.mxu0 0.0
        %971 = vmatpush1.msra.mxu0 %v928
        %972 = vmatprep.subr.mxu0 0.0
        %973 = vmatpush1.msra.mxu0 %v929
        %974 = vmatprep.subr.mxu0 0.0
        %975 = vmatpush1.msra.mxu0 0.0
        %976 = vmatprep.subr.mxu0 0.0
        %977 = vmatpush1.msra.mxu0 0.0
        %978 = vmatprep.subr.mxu0 0.0
        %979 = vmatpush1.msra.mxu0 0.0
        %980 = vmatprep.subr.mxu0 0.0
        %981 = vmatpush1.msra.mxu0 0.0
        %982 = vmatprep.subr.mxu0 0.0
        %983 = vmatpush1.msra.mxu0 0.0
        %984 = vmatprep.subr.mxu0 0.0
        %985 = vmatpush1.msra.mxu0 0.0
        %986 = vmatprep.subr.mxu0 0.0
        %987 = vmatpush1.msra.mxu0 0.0
        %988 = vmatprep.subr.mxu0 0.0
        %989 = vmatpush1.msra.mxu0 0.0
        %990 = vmatprep.subr.mxu0 0.0
        %991 = vmatpush1.msra.mxu0 0.0
        %992 = vmatprep.subr.mxu0 0.0
        %993 = vmatpush1.msra.mxu0 0.0
        %994 = vmatprep.subr.mxu0 0.0
        %995 = vmatpush1.msra.mxu0 0.0
        %996 = vmatprep.subr.mxu0 0.0
        %997 = vmatpush1.msra.mxu0 0.0
        %998 = vmatprep.subr.mxu0 0.0
        %999 = vmatpush1.msra.mxu0 0.0
        %1000 = vmatprep.subr.mxu0 0.0
        %1001 = vmatpush1.msra.mxu0 0.0
        %1002 = vmatprep.subr.mxu0 0.0
        %1003 = vmatpush1.msra.mxu0 0.0
        %1004 = vmatprep.subr.mxu0 0.0
        %1005 = vmatpush1.msra.mxu0 0.0
        %1006 = vmatprep.subr.mxu0 0.0
        %1007 = vmatpush1.msra.mxu0 0.0
        %1008 = vmatprep.subr.mxu0 0.0
        %1009 = vmatpush1.msra.mxu0 0.0
        %1010 = vmatprep.subr.mxu0 0.0
        %1011 = vmatpush1.msra.mxu0 0.0
        %1012 = vmatprep.subr.mxu0 0.0
        %1013 = vmatpush1.msra.mxu0 0.0
        %1014 = vmatprep.subr.mxu0 0.0
        %1015 = vmatpush1.msra.mxu0 0.0
        %1016 = vmatprep.subr.mxu0 0.0
        %1017 = vmatpush1.msra.mxu0 0.0
        %1018 = vmatprep.subr.mxu0 0.0
        %1019 = vmatpush1.msra.mxu0 0.0
        %1020 = vmatprep.subr.mxu0 0.0
        %1021 = vmatpush1.msra.mxu0 0.0
        %1022 = vmatprep.subr.mxu0 0.0
        %1023 = vmatpush1.msra.mxu0 0.0
        %1024 = vmatprep.subr.mxu0 0.0
        %1025 = vmatpush1.msra.mxu0 0.0
        %1026 = vmatprep.subr.mxu0 0.0
        %1027 = vmatpush1.msra.mxu0 0.0
        %1028 = vmatprep.subr.mxu0 0.0
        %1029 = vmatpush1.msra.mxu0 0.0
        %1030 = vmatprep.subr.mxu0 0.0
        %1031 = vmatpush1.msra.mxu0 0.0
        %1032 = vmatprep.subr.mxu0 0.0
        %1033 = vmatpush1.msra.mxu0 0.0
        %1034 = vmatprep.mubr.f32.mxu0 0.0
        %1035 = vmatmul.mubr.f32.gmra.mrb[0].mxu0 %v959
        %v1036 = vpop.f32.mrb[0].mxu0
        %v1037 = vadd.f32 %v941, %v1036
        %v1038 = vpop.f32.mrb[0].mxu0
        %1039 = vmatprep.mubr.f32.mxu0 0.0
        %1040 = vmatmul.mubr.f32.gmra.mrb[0].mxu0 %v962
        %v1041 = vpop.f32.mrb[0].mxu0
        %v1042 = vadd.f32 %v946, %v1041
        %v1043 = vpop.f32.mrb[0].mxu0
        %1044 = vmatprep.mubr.f32.mxu0 0.0
        %1045 = vmatmul.mubr.f32.gmra.mrb[0].mxu0 %v965
        %v1046 = vpop.f32.mrb[0].mxu0
        %v1047 = vadd.f32 %v951, %v1046
        %v1048 = vpop.f32.mrb[0].mxu0
        %1049 = vmatprep.mubr.f32.mxu0 0.0
        %1050 = vmatmul.mubr.f32.gmra.mrb[0].mxu0 %v968
        %v1051 = vpop.f32.mrb[0].mxu0
        %v1052 = vadd.f32 %v956, %v1051
        %v1053 = vpop.f32.mrb[0].mxu0
        %1054 = vdwg.mxu0
        %v1055 = vmax.f32 %v809, %v811
        %v1056 = vmax.f32 %v810, %v812
        %v1057 = vsel %vm829, 1, 0
        %vm1058 = vcmp.eq.s32.totalorder %v1057, 1
        %v1059 = vsel %vm1058, %v813, -inf
        %v1060 = vsel %vm1058, %v814, -inf
        %v1061 = vmax.f32 %v1055, %v1059
        %v1062 = vmax.f32 %v1056, %v1060
        %v1063 = vadd.f32 %v809, %v811
        %v1064 = vadd.f32 %v810, %v812
        %v1065 = vld [vmem:[#allocation6] sm:$0xff]
        %v1066 = vld [vmem:[#allocation6 + $0x8] sm:$0xff]
        %v1067 = vld [vmem:[#allocation9] sm:$0xff]
        %v1068 = vld [vmem:[#allocation9 + $0x8] sm:$0xff]
        %v1070 = vsel %vm832, %v1067, 0
        %v1073 = vsel %vm832, %v1068, 0
        %1075 = vmatprep.subr.mxu0 0.0
        %1076 = vmatpush1.msra.mxu0 %v809
        %1077 = vmatprep.subr.mxu0 0.0
        %1078 = vmatpush1.msra.mxu0 %v810
        %1079 = vmatprep.subr.mxu0 0.0
        %1080 = vmatpush1.msra.mxu0 0.0
        %1081 = vmatprep.subr.mxu0 0.0
        %1082 = vmatpush1.msra.mxu0 0.0
        %1083 = vmatprep.subr.mxu0 0.0
        %1084 = vmatpush1.msra.mxu0 0.0
        %1085 = vmatprep.subr.mxu0 0.0
        %1086 = vmatpush1.msra.mxu0 0.0
        %1087 = vmatprep.subr.mxu0 0.0
        %1088 = vmatpush1.msra.mxu0 0.0
        %1089 = vmatprep.subr.mxu0 0.0
        %1090 = vmatpush1.msra.mxu0 0.0
        %1091 = vmatprep.subr.mxu0 0.0
        %1092 = vmatpush1.msra.mxu0 0.0
        %1093 = vmatprep.subr.mxu0 0.0
        %1094 = vmatpush1.msra.mxu0 0.0
        %1095 = vmatprep.subr.mxu0 0.0
        %1096 = vmatpush1.msra.mxu0 0.0
        %1097 = vmatprep.subr.mxu0 0.0
        %1098 = vmatpush1.msra.mxu0 0.0
        %1099 = vmatprep.subr.mxu0 0.0
        %1100 = vmatpush1.msra.mxu0 0.0
        %1101 = vmatprep.subr.mxu0 0.0
        %1102 = vmatpush1.msra.mxu0 0.0
        %1103 = vmatprep.subr.mxu0 0.0
        %1104 = vmatpush1.msra.mxu0 0.0
        %1105 = vmatprep.subr.mxu0 0.0
        %1106 = vmatpush1.msra.mxu0 0.0
        %1107 = vmatprep.subr.mxu0 0.0
        %1108 = vmatpush1.msra.mxu0 0.0
        %1109 = vmatprep.subr.mxu0 0.0
        %1110 = vmatpush1.msra.mxu0 0.0
        %1111 = vmatprep.subr.mxu0 0.0
        %1112 = vmatpush1.msra.mxu0 0.0
        %1113 = vmatprep.subr.mxu0 0.0
        %1114 = vmatpush1.msra.mxu0 0.0
        %1115 = vmatprep.subr.mxu0 0.0
        %1116 = vmatpush1.msra.mxu0 0.0
        %1117 = vmatprep.subr.mxu0 0.0
        %1118 = vmatpush1.msra.mxu0 0.0
        %1119 = vmatprep.subr.mxu0 0.0
        %1120 = vmatpush1.msra.mxu0 0.0
        %1121 = vmatprep.subr.mxu0 0.0
        %1122 = vmatpush1.msra.mxu0 0.0
        %1123 = vmatprep.subr.mxu0 0.0
        %1124 = vmatpush1.msra.mxu0 0.0
        %1125 = vmatprep.subr.mxu0 0.0
        %1126 = vmatpush1.msra.mxu0 0.0
        %1127 = vmatprep.subr.mxu0 0.0
        %1128 = vmatpush1.msra.mxu0 0.0
        %1129 = vmatprep.subr.mxu0 0.0
        %1130 = vmatpush1.msra.mxu0 0.0
        %1131 = vmatprep.subr.mxu0 0.0
        %1132 = vmatpush1.msra.mxu0 0.0
        %1133 = vmatprep.subr.mxu0 0.0
        %1134 = vmatpush1.msra.mxu0 0.0
        %1135 = vmatprep.subr.mxu0 0.0
        %1136 = vmatpush1.msra.mxu0 0.0
        %1137 = vmatprep.subr.mxu0 0.0
        %1138 = vmatpush1.msra.mxu0 0.0
        %1139 = vmatprep.mubr.f32.mxu0 0.0
        %1140 = vmatmul.mubr.f32.gmra.mrb[0].mxu0 %v1070
        %v1141 = vpop.f32.mrb[0].mxu0
        %v1142 = vadd.f32 0.0, %v1141
        %v1143 = vpop.f32.mrb[0].mxu0
        %1144 = vmatprep.mubr.f32.mxu0 0.0
        %1145 = vmatmul.mubr.f32.gmra.mrb[0].mxu0 %v1073
        %v1146 = vpop.f32.mrb[0].mxu0
        %v1147 = vadd.f32 0.0, %v1146
        %v1148 = vpop.f32.mrb[0].mxu0
        %1149 = vdwg.mxu0
        %v1151 = vsel %vm832, %v1065, 0
        %v1154 = vsel %vm832, %v1066, 0
        %1156 = vmatprep.subr.mxu0 0.0
        %1157 = vmatpush1.msra.mxu0 %v813
        %1158 = vmatprep.subr.mxu0 0.0
        %1159 = vmatpush1.msra.mxu0 %v814
        %1160 = vmatprep.subr.mxu0 0.0
        %1161 = vmatpush1.msra.mxu0 0.0
        %1162 = vmatprep.subr.mxu0 0.0
        %1163 = vmatpush1.msra.mxu0 0.0
        %1164 = vmatprep.subr.mxu0 0.0
        %1165 = vmatpush1.msra.mxu0 0.0
        %1166 = vmatprep.subr.mxu0 0.0
        %1167 = vmatpush1.msra.mxu0 0.0
        %1168 = vmatprep.subr.mxu0 0.0
        %1169 = vmatpush1.msra.mxu0 0.0
        %1170 = vmatprep.subr.mxu0 0.0
        %1171 = vmatpush1.msra.mxu0 0.0
        %1172 = vmatprep.subr.mxu0 0.0
        %1173 = vmatpush1.msra.mxu0 0.0
        %1174 = vmatprep.subr.mxu0 0.0
        %1175 = vmatpush1.msra.mxu0 0.0
        %1176 = vmatprep.subr.mxu0 0.0
        %1177 = vmatpush1.msra.mxu0 0.0
        %1178 = vmatprep.subr.mxu0 0.0
        %1179 = vmatpush1.msra.mxu0 0.0
        %1180 = vmatprep.subr.mxu0 0.0
        %1181 = vmatpush1.msra.mxu0 0.0
        %1182 = vmatprep.subr.mxu0 0.0
        %1183 = vmatpush1.msra.mxu0 0.0
        %1184 = vmatprep.subr.mxu0 0.0
        %1185 = vmatpush1.msra.mxu0 0.0
        %1186 = vmatprep.subr.mxu0 0.0
        %1187 = vmatpush1.msra.mxu0 0.0
        %1188 = vmatprep.subr.mxu0 0.0
        %1189 = vmatpush1.msra.mxu0 0.0
        %1190 = vmatprep.subr.mxu0 0.0
        %1191 = vmatpush1.msra.mxu0 0.0
        %1192 = vmatprep.subr.mxu0 0.0
        %1193 = vmatpush1.msra.mxu0 0.0
        %1194 = vmatprep.subr.mxu0 0.0
        %1195 = vmatpush1.msra.mxu0 0.0
        %1196 = vmatprep.subr.mxu0 0.0
        %1197 = vmatpush1.msra.mxu0 0.0
        %1198 = vmatprep.subr.mxu0 0.0
        %1199 = vmatpush1.msra.mxu0 0.0
        %1200 = vmatprep.subr.mxu0 0.0
        %1201 = vmatpush1.msra.mxu0 0.0
        %1202 = vmatprep.subr.mxu0 0.0
        %1203 = vmatpush1.msra.mxu0 0.0
        %1204 = vmatprep.subr.mxu0 0.0
        %1205 = vmatpush1.msra.mxu0 0.0
        %1206 = vmatprep.subr.mxu0 0.0
        %1207 = vmatpush1.msra.mxu0 0.0
        %1208 = vmatprep.subr.mxu0 0.0
        %1209 = vmatpush1.msra.mxu0 0.0
        %1210 = vmatprep.subr.mxu0 0.0
        %1211 = vmatpush1.msra.mxu0 0.0
        %1212 = vmatprep.subr.mxu0 0.0
        %1213 = vmatpush1.msra.mxu0 0.0
        %1214 = vmatprep.subr.mxu0 0.0
        %1215 = vmatpush1.msra.mxu0 0.0
        %1216 = vmatprep.subr.mxu0 0.0
        %1217 = vmatpush1.msra.mxu0 0.0
        %1218 = vmatprep.subr.mxu0 0.0
        %1219 = vmatpush1.msra.mxu0 0.0
        %1220 = vmatprep.mubr.f32.mxu0 0.0
        %1221 = vmatmul.mubr.f32.gmra.mrb[0].mxu0 %v1151
        %v1222 = vpop.f32.mrb[0].mxu0
        %v1223 = vadd.f32 %v1142, %v1222
        %v1224 = vpop.f32.mrb[0].mxu0
        %1225 = vmatprep.mubr.f32.mxu0 0.0
        %1226 = vmatmul.mubr.f32.gmra.mrb[0].mxu0 %v1154
        %v1227 = vpop.f32.mrb[0].mxu0
        %v1228 = vadd.f32 %v1147, %v1227
        %v1229 = vpop.f32.mrb[0].mxu0
        %1230 = vdwg.mxu0
        %v1231 = vld [vmem:[%s8] sm:$0xff]
        %v1232 = vld [vmem:[%s8 + $0x8] sm:$0xff]
        %v1234 = vsel %vm832, %v1231, 0
        %v1237 = vsel %vm832, %v1232, 0
        %1239 = vmatprep.subr.mxu0 0.0
        %1240 = vmatpush1.msra.mxu0 %v811
        %1241 = vmatprep.subr.mxu0 0.0
        %1242 = vmatpush1.msra.mxu0 %v812
        %1243 = vmatprep.subr.mxu0 0.0
        %1244 = vmatpush1.msra.mxu0 0.0
        %1245 = vmatprep.subr.mxu0 0.0
        %1246 = vmatpush1.msra.mxu0 0.0
        %1247 = vmatprep.subr.mxu0 0.0
        %1248 = vmatpush1.msra.mxu0 0.0
        %1249 = vmatprep.subr.mxu0 0.0
        %1250 = vmatpush1.msra.mxu0 0.0
        %1251 = vmatprep.subr.mxu0 0.0
        %1252 = vmatpush1.msra.mxu0 0.0
        %1253 = vmatprep.subr.mxu0 0.0
        %1254 = vmatpush1.msra.mxu0 0.0
        %1255 = vmatprep.subr.mxu0 0.0
        %1256 = vmatpush1.msra.mxu0 0.0
        %1257 = vmatprep.subr.mxu0 0.0
        %1258 = vmatpush1.msra.mxu0 0.0
        %1259 = vmatprep.subr.mxu0 0.0
        %1260 = vmatpush1.msra.mxu0 0.0
        %1261 = vmatprep.subr.mxu0 0.0
        %1262 = vmatpush1.msra.mxu0 0.0
        %1263 = vmatprep.subr.mxu0 0.0
        %1264 = vmatpush1.msra.mxu0 0.0
        %1265 = vmatprep.subr.mxu0 0.0
        %1266 = vmatpush1.msra.mxu0 0.0
        %1267 = vmatprep.subr.mxu0 0.0
        %1268 = vmatpush1.msra.mxu0 0.0
        %1269 = vmatprep.subr.mxu0 0.0
        %1270 = vmatpush1.msra.mxu0 0.0
        %1271 = vmatprep.subr.mxu0 0.0
        %1272 = vmatpush1.msra.mxu0 0.0
        %1273 = vmatprep.subr.mxu0 0.0
        %1274 = vmatpush1.msra.mxu0 0.0
        %1275 = vmatprep.subr.mxu0 0.0
        %1276 = vmatpush1.msra.mxu0 0.0
        %1277 = vmatprep.subr.mxu0 0.0
        %1278 = vmatpush1.msra.mxu0 0.0
        %1279 = vmatprep.subr.mxu0 0.0
        %1280 = vmatpush1.msra.mxu0 0.0
        %1281 = vmatprep.subr.mxu0 0.0
        %1282 = vmatpush1.msra.mxu0 0.0
        %1283 = vmatprep.subr.mxu0 0.0
        %1284 = vmatpush1.msra.mxu0 0.0
        %1285 = vmatprep.subr.mxu0 0.0
        %1286 = vmatpush1.msra.mxu0 0.0
        %1287 = vmatprep.subr.mxu0 0.0
        %1288 = vmatpush1.msra.mxu0 0.0
        %1289 = vmatprep.subr.mxu0 0.0
        %1290 = vmatpush1.msra.mxu0 0.0
        %1291 = vmatprep.subr.mxu0 0.0
        %1292 = vmatpush1.msra.mxu0 0.0
        %1293 = vmatprep.subr.mxu0 0.0
        %1294 = vmatpush1.msra.mxu0 0.0
        %1295 = vmatprep.subr.mxu0 0.0
        %1296 = vmatpush1.msra.mxu0 0.0
        %1297 = vmatprep.subr.mxu0 0.0
        %1298 = vmatpush1.msra.mxu0 0.0
        %1299 = vmatprep.subr.mxu0 0.0
        %1300 = vmatpush1.msra.mxu0 0.0
        %1301 = vmatprep.subr.mxu0 0.0
        %1302 = vmatpush1.msra.mxu0 0.0
        %1303 = vmatprep.mubr.f32.mxu0 0.0
        %1304 = vmatmul.mubr.f32.gmra.mrb[0].mxu0 %v1234
        %v1305 = vpop.f32.mrb[0].mxu0
        %v1306 = vadd.f32 0.0, %v1305
        %v1307 = vpop.f32.mrb[0].mxu0
        %1308 = vmatprep.mubr.f32.mxu0 0.0
        %1309 = vmatmul.mubr.f32.gmra.mrb[0].mxu0 %v1237
        %v1310 = vpop.f32.mrb[0].mxu0
        %v1311 = vadd.f32 0.0, %v1310
        %v1312 = vpop.f32.mrb[0].mxu0
        %1313 = vdwg.mxu0
        %v1314 = vadd.f32 %v1223, %v1306
        %v1315 = vadd.f32 %v1228, %v1311
        %v1316 = vld [vmem:[%s9] sm:$0xff]
        %v1317 = vld [vmem:[%s9 + $0x8] sm:$0xff]
        %1319 = vset.pattern.permute.xlu0 0
        %1320 = vperm.xlu0 %1319, %v1316
        %v1321 = vpop.permute.xlu0 %1320
        %1324 = vset.pattern.permute.xlu0 0
        %1325 = vperm.xlu0 %1324, %v1317
        %v1326 = vpop.permute.xlu0 %1325
        %v1328 = vadd.f32 %v1314, %v1321
        %v1329 = vadd.f32 %v1315, %v1326
        %v1330 = vld [vmem:[%s10] sm:$0xff]
        %v1331 = vld [vmem:[%s10 + $0x8] sm:$0xff]
        %v1332 = vcvt.s32.f32 %v1057
        %1334 = vset.pattern.permute.xlu0 0
        %1335 = vperm.xlu0 %1334, %v1330
        %v1336 = vpop.permute.xlu0 %1335
        %1339 = vset.pattern.permute.xlu0 0
        %1340 = vperm.xlu0 %1339, %v1331
        %v1341 = vpop.permute.xlu0 %1340
        %v1343 = vmul.f32 %v1336, %v1332
        %v1344 = vmul.f32 %v1341, %v1332
        %v1345 = vadd.f32 %v1328, %v1343
        %v1346 = vadd.f32 %v1329, %v1344
        %v1347 = vadd.f32 %v1061, %v1345
        %v1348 = vadd.f32 %v1062, %v1346
        %1349 = vmatprep.subr.mxu0 0.0
        %1350 = vmatpush1.msra.mxu0 %v1347
        %1351 = vmatprep.subr.mxu0 0.0
        %1352 = vmatpush1.msra.mxu0 %v1348
        %1353 = vmatprep.subr.mxu0 0.0
        %1354 = vmatpush1.msra.mxu0 0.0
        %1355 = vmatprep.subr.mxu0 0.0
        %1356 = vmatpush1.msra.mxu0 0.0
        %1357 = vmatprep.subr.mxu0 0.0
        %1358 = vmatpush1.msra.mxu0 0.0
        %1359 = vmatprep.subr.mxu0 0.0
        %1360 = vmatpush1.msra.mxu0 0.0
        %1361 = vmatprep.subr.mxu0 0.0
        %1362 = vmatpush1.msra.mxu0 0.0
        %1363 = vmatprep.subr.mxu0 0.0
        %1364 = vmatpush1.msra.mxu0 0.0
        %1365 = vmatprep.subr.mxu0 0.0
        %1366 = vmatpush1.msra.mxu0 0.0
        %1367 = vmatprep.subr.mxu0 0.0
        %1368 = vmatpush1.msra.mxu0 0.0
        %1369 = vmatprep.subr.mxu0 0.0
        %1370 = vmatpush1.msra.mxu0 0.0
        %1371 = vmatprep.subr.mxu0 0.0
        %1372 = vmatpush1.msra.mxu0 0.0
        %1373 = vmatprep.subr.mxu0 0.0
        %1374 = vmatpush1.msra.mxu0 0.0
        %1375 = vmatprep.subr.mxu0 0.0
        %1376 = vmatpush1.msra.mxu0 0.0
        %1377 = vmatprep.subr.mxu0 0.0
        %1378 = vmatpush1.msra.mxu0 0.0
        %1379 = vmatprep.subr.mxu0 0.0
        %1380 = vmatpush1.msra.mxu0 0.0
        %1381 = vmatprep.subr.mxu0 0.0
        %1382 = vmatpush1.msra.mxu0 0.0
        %1383 = vmatprep.subr.mxu0 0.0
        %1384 = vmatpush1.msra.mxu0 0.0
        %1385 = vmatprep.subr.mxu0 0.0
        %1386 = vmatpush1.msra.mxu0 0.0
        %1387 = vmatprep.subr.mxu0 0.0
        %1388 = vmatpush1.msra.mxu0 0.0
        %1389 = vmatprep.subr.mxu0 0.0
        %1390 = vmatpush1.msra.mxu0 0.0
        %1391 = vmatprep.subr.mxu0 0.0
        %1392 = vmatpush1.msra.mxu0 0.0
        %1393 = vmatprep.subr.mxu0 0.0
        %1394 = vmatpush1.msra.mxu0 0.0
        %1395 = vmatprep.subr.mxu0 0.0
        %1396 = vmatpush1.msra.mxu0 0.0
        %1397 = vmatprep.subr.mxu0 0.0
        %1398 = vmatpush1.msra.mxu0 0.0
        %1399 = vmatprep.subr.mxu0 0.0
        %1400 = vmatpush1.msra.mxu0 0.0
        %1401 = vmatprep.subr.mxu0 0.0
        %1402 = vmatpush1.msra.mxu0 0.0
        %1403 = vmatprep.subr.mxu0 0.0
        %1404 = vmatpush1.msra.mxu0 0.0
        %1405 = vmatprep.subr.mxu0 0.0
        %1406 = vmatpush1.msra.mxu0 0.0
        %1407 = vmatprep.subr.mxu0 0.0
        %1408 = vmatpush1.msra.mxu0 0.0
        %1409 = vmatprep.subr.mxu0 0.0
        %1410 = vmatpush1.msra.mxu0 0.0
        %1411 = vmatprep.subr.mxu0 0.0
        %1412 = vmatpush1.msra.mxu0 0.0
        %1413 = vmatprep.mubr.f32.mxu0 0.0
        %1414 = vmatmul.mubr.f32.gmra.mrb[0].mxu0 %v959
        %v1415 = vpop.f32.mrb[0].mxu0
        %v1416 = vadd.f32 %v941, %v1415
        %v1417 = vpop.f32.mrb[0].mxu0
        %1418 = vmatprep.mubr.f32.mxu0 0.0
        %1419 = vmatmul.mubr.f32.gmra.mrb[0].mxu0 %v962
        %v1420 = vpop.f32.mrb[0].mxu0
        %v1421 = vadd.f32 %v946, %v1420
        %v1422 = vpop.f32.mrb[0].mxu0
        %1423 = vmatprep.mubr.f32.mxu0 0.0
        %1424 = vmatmul.mubr.f32.gmra.mrb[0].mxu0 %v965
        %v1425 = vpop.f32.mrb[0].mxu0
        %v1426 = vadd.f32 %v951, %v1425
        %v1427 = vpop.f32.mrb[0].mxu0
        %1428 = vmatprep.mubr.f32.mxu0 0.0
        %1429 = vmatmul.mubr.f32.gmra.mrb[0].mxu0 %v968
        %v1430 = vpop.f32.mrb[0].mxu0
        %v1431 = vadd.f32 %v956, %v1430
        %v1432 = vpop.f32.mrb[0].mxu0
        %1433 = vdwg.mxu0
        %v1434 = vld [vmem:[%s13] sm:$0xff]
        %v1435 = vld [vmem:[%s13 + $0x8] sm:$0xff]
        %v1436 = vld [vmem:[%s14] sm:$0xff]
        %v1437 = vld [vmem:[%s14 + $0x8] sm:$0xff]
        %1439 = vset.pattern.permute.xlu0 0
        %1440 = vperm.xlu0 %1439, %v1436
        %v1441 = vpop.permute.xlu0 %1440
        %1444 = vset.pattern.permute.xlu0 0
        %1445 = vperm.xlu0 %1444, %v1437
        %v1446 = vpop.permute.xlu0 %1445
        %v1449 = vsel %vm832, %v1434, 0
        %v1452 = vsel %vm832, %v1435, 0
        %1454 = vmatprep.subr.mxu0 0.0
        %1455 = vmatpush1.msra.mxu0 %v807
        %1456 = vmatprep.subr.mxu0 0.0
        %1457 = vmatpush1.msra.mxu0 %v808
        %1458 = vmatprep.subr.mxu0 0.0
        %1459 = vmatpush1.msra.mxu0 0.0
        %1460 = vmatprep.subr.mxu0 0.0
        %1461 = vmatpush1.msra.mxu0 0.0
        %1462 = vmatprep.subr.mxu0 0.0
        %1463 = vmatpush1.msra.mxu0 0.0
        %1464 = vmatprep.subr.mxu0 0.0
        %1465 = vmatpush1.msra.mxu0 0.0
        %1466 = vmatprep.subr.mxu0 0.0
        %1467 = vmatpush1.msra.mxu0 0.0
        %1468 = vmatprep.subr.mxu0 0.0
        %1469 = vmatpush1.msra.mxu0 0.0
        %1470 = vmatprep.subr.mxu0 0.0
        %1471 = vmatpush1.msra.mxu0 0.0
        %1472 = vmatprep.subr.mxu0 0.0
        %1473 = vmatpush1.msra.mxu0 0.0
        %1474 = vmatprep.subr.mxu0 0.0
        %1475 = vmatpush1.msra.mxu0 0.0
        %1476 = vmatprep.subr.mxu0 0.0
        %1477 = vmatpush1.msra.mxu0 0.0
        %1478 = vmatprep.subr.mxu0 0.0
        %1479 = vmatpush1.msra.mxu0 0.0
        %1480 = vmatprep.subr.mxu0 0.0
        %1481 = vmatpush1.msra.mxu0 0.0
        %1482 = vmatprep.subr.mxu0 0.0
        %1483 = vmatpush1.msra.mxu0 0.0
        %1484 = vmatprep.subr.mxu0 0.0
        %1485 = vmatpush1.msra.mxu0 0.0
        %1486 = vmatprep.subr.mxu0 0.0
        %1487 = vmatpush1.msra.mxu0 0.0
        %1488 = vmatprep.subr.mxu0 0.0
        %1489 = vmatpush1.msra.mxu0 0.0
        %1490 = vmatprep.subr.mxu0 0.0
        %1491 = vmatpush1.msra.mxu0 0.0
        %1492 = vmatprep.subr.mxu0 0.0
        %1493 = vmatpush1.msra.mxu0 0.0
        %1494 = vmatprep.subr.mxu0 0.0
        %1495 = vmatpush1.msra.mxu0 0.0
        %1496 = vmatprep.subr.mxu0 0.0
        %1497 = vmatpush1.msra.mxu0 0.0
        %1498 = vmatprep.subr.mxu0 0.0
        %1499 = vmatpush1.msra.mxu0 0.0
        %1500 = vmatprep.subr.mxu0 0.0
        %1501 = vmatpush1.msra.mxu0 0.0
        %1502 = vmatprep.subr.mxu0 0.0
        %1503 = vmatpush1.msra.mxu0 0.0
        %1504 = vmatprep.subr.mxu0 0.0
        %1505 = vmatpush1.msra.mxu0 0.0
        %1506 = vmatprep.subr.mxu0 0.0
        %1507 = vmatpush1.msra.mxu0 0.0
        %1508 = vmatprep.subr.mxu0 0.0
        %1509 = vmatpush1.msra.mxu0 0.0
        %1510 = vmatprep.subr.mxu0 0.0
        %1511 = vmatpush1.msra.mxu0 0.0
        %1512 = vmatprep.subr.mxu0 0.0
        %1513 = vmatpush1.msra.mxu0 0.0
        %1514 = vmatprep.subr.mxu0 0.0
        %1515 = vmatpush1.msra.mxu0 0.0
        %1516 = vmatprep.subr.mxu0 0.0
        %1517 = vmatpush1.msra.mxu0 0.0
        %1518 = vmatprep.mubr.f32.mxu0 0.0
        %1519 = vmatmul.mubr.f32.gmra.mrb[0].mxu0 %v1449
        %v1520 = vpop.f32.mrb[0].mxu0
        %v1521 = vadd.f32 %v1441, %v1520
        %v1522 = vpop.f32.mrb[0].mxu0
        %1523 = vmatprep.mubr.f32.mxu0 0.0
        %1524 = vmatmul.mubr.f32.gmra.mrb[0].mxu0 %v1452
        %v1525 = vpop.f32.mrb[0].mxu0
        %v1526 = vadd.f32 %v1446, %v1525
        %v1527 = vpop.f32.mrb[0].mxu0
        %1528 = vdwg.mxu0
        %v1529 = vadd.f32 %v1436, %v1436
        %v1530 = vadd.f32 %v1437, %v1437
        %1532 = vset.pattern.permute.xlu0 0
        %1533 = vperm.xlu0 %1532, %v1529
        %v1534 = vpop.permute.xlu0 %1533
        %1537 = vset.pattern.permute.xlu0 0
        %1538 = vperm.xlu0 %1537, %v1530
        %v1539 = vpop.permute.xlu0 %1538
        %1541 = vmatprep.subr.mxu0 0.0
        %1542 = vmatpush1.msra.mxu0 %v1063
        %1543 = vmatprep.subr.mxu0 0.0
        %1544 = vmatpush1.msra.mxu0 %v1064
        %1545 = vmatprep.subr.mxu0 0.0
        %1546 = vmatpush1.msra.mxu0 0.0
        %1547 = vmatprep.subr.mxu0 0.0
        %1548 = vmatpush1.msra.mxu0 0.0
        %1549 = vmatprep.subr.mxu0 0.0
        %1550 = vmatpush1.msra.mxu0 0.0
        %1551 = vmatprep.subr.mxu0 0.0
        %1552 = vmatpush1.msra.mxu0 0.0
        %1553 = vmatprep.subr.mxu0 0.0
        %1554 = vmatpush1.msra.mxu0 0.0
        %1555 = vmatprep.subr.mxu0 0.0
        %1556 = vmatpush1.msra.mxu0 0.0
        %1557 = vmatprep.subr.mxu0 0.0
        %1558 = vmatpush1.msra.mxu0 0.0
        %1559 = vmatprep.subr.mxu0 0.0
        %1560 = vmatpush1.msra.mxu0 0.0
        %1561 = vmatprep.subr.mxu0 0.0
        %1562 = vmatpush1.msra.mxu0 0.0
        %1563 = vmatprep.subr.mxu0 0.0
        %1564 = vmatpush1.msra.mxu0 0.0
        %1565 = vmatprep.subr.mxu0 0.0
        %1566 = vmatpush1.msra.mxu0 0.0
        %1567 = vmatprep.subr.mxu0 0.0
        %1568 = vmatpush1.msra.mxu0 0.0
        %1569 = vmatprep.subr.mxu0 0.0
        %1570 = vmatpush1.msra.mxu0 0.0
        %1571 = vmatprep.subr.mxu0 0.0
        %1572 = vmatpush1.msra.mxu0 0.0
        %1573 = vmatprep.subr.mxu0 0.0
        %1574 = vmatpush1.msra.mxu0 0.0
        %1575 = vmatprep.subr.mxu0 0.0
        %1576 = vmatpush1.msra.mxu0 0.0
        %1577 = vmatprep.subr.mxu0 0.0
        %1578 = vmatpush1.msra.mxu0 0.0
        %1579 = vmatprep.subr.mxu0 0.0
        %1580 = vmatpush1.msra.mxu0 0.0
        %1581 = vmatprep.subr.mxu0 0.0
        %1582 = vmatpush1.msra.mxu0 0.0
        %1583 = vmatprep.subr.mxu0 0.0
        %1584 = vmatpush1.msra.mxu0 0.0
        %1585 = vmatprep.subr.mxu0 0.0
        %1586 = vmatpush1.msra.mxu0 0.0
        %1587 = vmatprep.subr.mxu0 0.0
        %1588 = vmatpush1.msra.mxu0 0.0
        %1589 = vmatprep.subr.mxu0 0.0
        %1590 = vmatpush1.msra.mxu0 0.0
        %1591 = vmatprep.subr.mxu0 0.0
        %1592 = vmatpush1.msra.mxu0 0.0
        %1593 = vmatprep.subr.mxu0 0.0
        %1594 = vmatpush1.msra.mxu0 0.0
        %1595 = vmatprep.subr.mxu0 0.0
        %1596 = vmatpush1.msra.mxu0 0.0
        %1597 = vmatprep.subr.mxu0 0.0
        %1598 = vmatpush1.msra.mxu0 0.0
        %1599 = vmatprep.subr.mxu0 0.0
        %1600 = vmatpush1.msra.mxu0 0.0
        %1601 = vmatprep.subr.mxu0 0.0
        %1602 = vmatpush1.msra.mxu0 0.0
        %1603 = vmatprep.subr.mxu0 0.0
        %1604 = vmatpush1.msra.mxu0 0.0
        %1605 = vmatprep.mubr.f32.mxu0 0.0
        %1606 = vmatmul.mubr.f32.gmra.mrb[0].mxu0 %v1449
        %v1607 = vpop.f32.mrb[0].mxu0
        %v1608 = vadd.f32 %v1534, %v1607
        %v1609 = vpop.f32.mrb[0].mxu0
        %1610 = vmatprep.mubr.f32.mxu0 0.0
        %1611 = vmatmul.mubr.f32.gmra.mrb[0].mxu0 %v1452
        %v1612 = vpop.f32.mrb[0].mxu0
        %v1613 = vadd.f32 %v1539, %v1612
        %v1614 = vpop.f32.mrb[0].mxu0
        %1615 = vdwg.mxu0
        %1616 = vmatprep.subr.mxu0 0.0
        %1617 = vmatpush1.xpose.msra.mxu0 %v1426
        %1618 = vmatprep.subr.mxu0 0.0
        %1619 = vmatpush1.xpose.msra.mxu0 %v1431
        %1620 = vmatprep.subr.mxu0 0.0
        %1621 = vmatpush1.xpose.msra.mxu0 0.0
        %1622 = vmatprep.subr.mxu0 0.0
        %1623 = vmatpush1.xpose.msra.mxu0 0.0
        %1624 = vmatprep.subr.mxu0 0.0
        %1625 = vmatpush1.xpose.msra.mxu0 0.0
        %1626 = vmatprep.subr.mxu0 0.0
        %1627 = vmatpush1.xpose.msra.mxu0 0.0
        %1628 = vmatprep.subr.mxu0 0.0
        %1629 = vmatpush1.xpose.msra.mxu0 0.0
        %1630 = vmatprep.subr.mxu0 0.0
        %1631 = vmatpush1.xpose.msra.mxu0 0.0
        %1632 = vmatprep.subr.mxu0 0.0
        %1633 = vmatpush1.xpose.msra.mxu0 0.0
        %1634 = vmatprep.subr.mxu0 0.0
        %1635 = vmatpush1.xpose.msra.mxu0 0.0
        %1636 = vmatprep.subr.mxu0 0.0
        %1637 = vmatpush1.xpose.msra.mxu0 0.0
        %1638 = vmatprep.subr.mxu0 0.0
        %1639 = vmatpush1.xpose.msra.mxu0 0.0
        %1640 = vmatprep.subr.mxu0 0.0
        %1641 = vmatpush1.xpose.msra.mxu0 0.0
        %1642 = vmatprep.subr.mxu0 0.0
        %1643 = vmatpush1.xpose.msra.mxu0 0.0
        %1644 = vmatprep.subr.mxu0 0.0
        %1645 = vmatpush1.xpose.msra.mxu0 0.0
        %1646 = vmatprep.subr.mxu0 0.0
        %1647 = vmatpush1.xpose.msra.mxu0 0.0
        %1648 = vmatprep.subr.mxu0 0.0
        %1649 = vmatpush1.xpose.msra.mxu0 0.0
        %1650 = vmatprep.subr.mxu0 0.0
        %1651 = vmatpush1.xpose.msra.mxu0 0.0
        %1652 = vmatprep.subr.mxu0 0.0
        %1653 = vmatpush1.xpose.msra.mxu0 0.0
        %1654 = vmatprep.subr.mxu0 0.0
        %1655 = vmatpush1.xpose.msra.mxu0 0.0
        %1656 = vmatprep.subr.mxu0 0.0
        %1657 = vmatpush1.xpose.msra.mxu0 0.0
        %1658 = vmatprep.subr.mxu0 0.0
        %1659 = vmatpush1.xpose.msra.mxu0 0.0
        %1660 = vmatprep.subr.mxu0 0.0
        %1661 = vmatpush1.xpose.msra.mxu0 0.0
        %1662 = vmatprep.subr.mxu0 0.0
        %1663 = vmatpush1.xpose.msra.mxu0 0.0
        %1664 = vmatprep.subr.mxu0 0.0
        %1665 = vmatpush1.xpose.msra.mxu0 0.0
        %1666 = vmatprep.subr.mxu0 0.0
        %1667 = vmatpush1.xpose.msra.mxu0 0.0
        %1668 = vmatprep.subr.mxu0 0.0
        %1669 = vmatpush1.xpose.msra.mxu0 0.0
        %1670 = vmatprep.subr.mxu0 0.0
        %1671 = vmatpush1.xpose.msra.mxu0 0.0
        %1672 = vmatprep.subr.mxu0 0.0
        %1673 = vmatpush1.xpose.msra.mxu0 0.0
        %1674 = vmatprep.subr.mxu0 0.0
        %1675 = vmatpush1.xpose.msra.mxu0 0.0
        %1676 = vmatprep.subr.mxu0 0.0
        %1677 = vmatpush1.xpose.msra.mxu0 0.0
        %1678 = vmatprep.subr.mxu0 0.0
        %1679 = vmatpush1.xpose.msra.mxu0 0.0
        %1680 = vmatprep.mubr.f32.mxu0 0.0
        %1681 = vmatmul.mubr.f32.gmra.mrb[0].mxu0 %v1521
        %v1682 = vpop.f32.mrb[0].mxu0
        %v1683 = vadd.f32 0.0, %v1682
        %v1684 = vpop.f32.mrb[0].mxu0
        %1685 = vmatprep.mubr.f32.mxu0 0.0
        %1686 = vmatmul.mubr.f32.gmra.mrb[0].mxu0 %v1526
        %v1687 = vpop.f32.mrb[0].mxu0
        %v1688 = vadd.f32 0.0, %v1687
        %v1689 = vpop.f32.mrb[0].mxu0
        %1690 = vdwg.mxu0
        %v1691 = vsel %vm832, %v1683, -inf
        %1692 = vmax.xlane.f32.xlu0 %v1691
        %v1693 = vpop.xlane.xlu0 %1692
        %v1694 = vsel %vm832, %v1688, -inf
        %1695 = vmax.xlane.f32.xlu0 %v1694
        %v1696 = vpop.xlane.xlu0 %1695
        %v1697 = vsub.f32 %v1683, %v1693
        %v1698 = vsub.f32 %v1688, %v1696
        %v1699 = vmul.f32 %v1697, 1.442695
        %v1700 = vpow.pop %v1699
        %v1701 = vmul.f32 %v1698, 1.442695
        %v1702 = vpow.pop %v1701
        %v1703 = vsel %vm832, %v1700, 0.0
        %1704 = vadd.xlane.f32.xlu0 %v1703
        %v1705 = vpop.xlane.xlu0 %1704
        %v1706 = vsel %vm832, %v1702, 0.0
        %1707 = vadd.xlane.f32.xlu0 %v1706
        %v1708 = vpop.xlane.xlu0 %1707
        %v1709 = vrcp.pop %v1705
        %v1710 = vrcp.pop %v1708
        %v1711 = vmul.f32 %v1700, %v1709
        %v1712 = vmul.f32 %v1702, %v1710
        %v1714 = vsel %vm832, %v1711, 0
        %v1717 = vsel %vm832, %v1712, 0
        %1719 = vmatprep.subr.mxu0 0.0
        %1720 = vmatpush1.msra.mxu0 %v1416
        %1721 = vmatprep.subr.mxu0 0.0
        %1722 = vmatpush1.msra.mxu0 %v1421
        %1723 = vmatprep.subr.mxu0 0.0
        %1724 = vmatpush1.msra.mxu0 0.0
        %1725 = vmatprep.subr.mxu0 0.0
        %1726 = vmatpush1.msra.mxu0 0.0
        %1727 = vmatprep.subr.mxu0 0.0
        %1728 = vmatpush1.msra.mxu0 0.0
        %1729 = vmatprep.subr.mxu0 0.0
        %1730 = vmatpush1.msra.mxu0 0.0
        %1731 = vmatprep.subr.mxu0 0.0
        %1732 = vmatpush1.msra.mxu0 0.0
        %1733 = vmatprep.subr.mxu0 0.0
        %1734 = vmatpush1.msra.mxu0 0.0
        %1735 = vmatprep.subr.mxu0 0.0
        %1736 = vmatpush1.msra.mxu0 0.0
        %1737 = vmatprep.subr.mxu0 0.0
        %1738 = vmatpush1.msra.mxu0 0.0
        %1739 = vmatprep.subr.mxu0 0.0
        %1740 = vmatpush1.msra.mxu0 0.0
        %1741 = vmatprep.subr.mxu0 0.0
        %1742 = vmatpush1.msra.mxu0 0.0
        %1743 = vmatprep.subr.mxu0 0.0
        %1744 = vmatpush1.msra.mxu0 0.0
        %1745 = vmatprep.subr.mxu0 0.0
        %1746 = vmatpush1.msra.mxu0 0.0
        %1747 = vmatprep.subr.mxu0 0.0
        %1748 = vmatpush1.msra.mxu0 0.0
        %1749 = vmatprep.subr.mxu0 0.0
        %1750 = vmatpush1.msra.mxu0 0.0
        %1751 = vmatprep.subr.mxu0 0.0
        %1752 = vmatpush1.msra.mxu0 0.0
        %1753 = vmatprep.subr.mxu0 0.0
        %1754 = vmatpush1.msra.mxu0 0.0
        %1755 = vmatprep.subr.mxu0 0.0
        %1756 = vmatpush1.msra.mxu0 0.0
        %1757 = vmatprep.subr.mxu0 0.0
        %1758 = vmatpush1.msra.mxu0 0.0
        %1759 = vmatprep.subr.mxu0 0.0
        %1760 = vmatpush1.msra.mxu0 0.0
        %1761 = vmatprep.subr.mxu0 0.0
        %1762 = vmatpush1.msra.mxu0 0.0
        %1763 = vmatprep.subr.mxu0 0.0
        %1764 = vmatpush1.msra.mxu0 0.0
        %1765 = vmatprep.subr.mxu0 0.0
        %1766 = vmatpush1.msra.mxu0 0.0
        %1767 = vmatprep.subr.mxu0 0.0
        %1768 = vmatpush1.msra.mxu0 0.0
        %1769 = vmatprep.subr.mxu0 0.0
        %1770 = vmatpush1.msra.mxu0 0.0
        %1771 = vmatprep.subr.mxu0 0.0
        %1772 = vmatpush1.msra.mxu0 0.0
        %1773 = vmatprep.subr.mxu0 0.0
        %1774 = vmatpush1.msra.mxu0 0.0
        %1775 = vmatprep.subr.mxu0 0.0
        %1776 = vmatpush1.msra.mxu0 0.0
        %1777 = vmatprep.subr.mxu0 0.0
        %1778 = vmatpush1.msra.mxu0 0.0
        %1779 = vmatprep.subr.mxu0 0.0
        %1780 = vmatpush1.msra.mxu0 0.0
        %1781 = vmatprep.subr.mxu0 0.0
        %1782 = vmatpush1.msra.mxu0 0.0
        %1783 = vmatprep.mubr.f32.mxu0 0.0
        %1784 = vmatmul.mubr.f32.gmra.mrb[0].mxu0 %v1714
        %v1785 = vpop.f32.mrb[0].mxu0
        %v1786 = vadd.f32 0.0, %v1785
        %v1787 = vpop.f32.mrb[0].mxu0
        %1788 = vmatprep.mubr.f32.mxu0 0.0
        %1789 = vmatmul.mubr.f32.gmra.mrb[0].mxu0 %v1717
        %v1790 = vpop.f32.mrb[0].mxu0
        %v1791 = vadd.f32 0.0, %v1790
        %v1792 = vpop.f32.mrb[0].mxu0
        %1793 = vdwg.mxu0
        %v1794 = vadd.f32 %v807, %v1786
        %v1795 = vadd.f32 %v808, %v1791
        %1796 = vst [vmem:[%s792] sm:$0xff] %v1794
        %1797 = vst [vmem:[%s792 + $0x8] sm:$0xff] %v1795
        %1798 = vmatprep.subr.mxu0 0.0
        %1799 = vmatpush1.xpose.msra.mxu0 %v1047
        %1800 = vmatprep.subr.mxu0 0.0
        %1801 = vmatpush1.xpose.msra.mxu0 %v1052
        %1802 = vmatprep.subr.mxu0 0.0
        %1803 = vmatpush1.xpose.msra.mxu0 0.0
        %1804 = vmatprep.subr.mxu0 0.0
        %1805 = vmatpush1.xpose.msra.mxu0 0.0
        %1806 = vmatprep.subr.mxu0 0.0
        %1807 = vmatpush1.xpose.msra.mxu0 0.0
        %1808 = vmatprep.subr.mxu0 0.0
        %1809 = vmatpush1.xpose.msra.mxu0 0.0
        %1810 = vmatprep.subr.mxu0 0.0
        %1811 = vmatpush1.xpose.msra.mxu0 0.0
        %1812 = vmatprep.subr.mxu0 0.0
        %1813 = vmatpush1.xpose.msra.mxu0 0.0
        %1814 = vmatprep.subr.mxu0 0.0
        %1815 = vmatpush1.xpose.msra.mxu0 0.0
        %1816 = vmatprep.subr.mxu0 0.0
        %1817 = vmatpush1.xpose.msra.mxu0 0.0
        %1818 = vmatprep.subr.mxu0 0.0
        %1819 = vmatpush1.xpose.msra.mxu0 0.0
        %1820 = vmatprep.subr.mxu0 0.0
        %1821 = vmatpush1.xpose.msra.mxu0 0.0
        %1822 = vmatprep.subr.mxu0 0.0
        %1823 = vmatpush1.xpose.msra.mxu0 0.0
        %1824 = vmatprep.subr.mxu0 0.0
        %1825 = vmatpush1.xpose.msra.mxu0 0.0
        %1826 = vmatprep.subr.mxu0 0.0
        %1827 = vmatpush1.xpose.msra.mxu0 0.0
        %1828 = vmatprep.subr.mxu0 0.0
        %1829 = vmatpush1.xpose.msra.mxu0 0.0
        %1830 = vmatprep.subr.mxu0 0.0
        %1831 = vmatpush1.xpose.msra.mxu0 0.0
        %1832 = vmatprep.subr.mxu0 0.0
        %1833 = vmatpush1.xpose.msra.mxu0 0.0
        %1834 = vmatprep.subr.mxu0 0.0
        %1835 = vmatpush1.xpose.msra.mxu0 0.0
        %1836 = vmatprep.subr.mxu0 0.0
        %1837 = vmatpush1.xpose.msra.mxu0 0.0
        %1838 = vmatprep.subr.mxu0 0.0
        %1839 = vmatpush1.xpose.msra.mxu0 0.0
        %1840 = vmatprep.subr.mxu0 0.0
        %1841 = vmatpush1.xpose.msra.mxu0 0.0
        %1842 = vmatprep.subr.mxu0 0.0
        %1843 = vmatpush1.xpose.msra.mxu0 0.0
        %1844 = vmatprep.subr.mxu0 0.0
        %1845 = vmatpush1.xpose.msra.mxu0 0.0
        %1846 = vmatprep.subr.mxu0 0.0
        %1847 = vmatpush1.xpose.msra.mxu0 0.0
        %1848 = vmatprep.subr.mxu0 0.0
        %1849 = vmatpush1.xpose.msra.mxu0 0.0
        %1850 = vmatprep.subr.mxu0 0.0
        %1851 = vmatpush1.xpose.msra.mxu0 0.0
        %1852 = vmatprep.subr.mxu0 0.0
        %1853 = vmatpush1.xpose.msra.mxu0 0.0
        %1854 = vmatprep.subr.mxu0 0.0
        %1855 = vmatpush1.xpose.msra.mxu0 0.0
        %1856 = vmatprep.subr.mxu0 0.0
        %1857 = vmatpush1.xpose.msra.mxu0 0.0
        %1858 = vmatprep.subr.mxu0 0.0
        %1859 = vmatpush1.xpose.msra.mxu0 0.0
        %1860 = vmatprep.subr.mxu0 0.0
        %1861 = vmatpush1.xpose.msra.mxu0 0.0
        %1862 = vmatprep.mubr.f32.mxu0 0.0
        %1863 = vmatmul.mubr.f32.gmra.mrb[0].mxu0 %v1608
        %v1864 = vpop.f32.mrb[0].mxu0
        %v1865 = vadd.f32 0.0, %v1864
        %v1866 = vpop.f32.mrb[0].mxu0
        %1867 = vmatprep.mubr.f32.mxu0 0.0
        %1868 = vmatmul.mubr.f32.gmra.mrb[0].mxu0 %v1613
        %v1869 = vpop.f32.mrb[0].mxu0
        %v1870 = vadd.f32 0.0, %v1869
        %v1871 = vpop.f32.mrb[0].mxu0
        %1872 = vdwg.mxu0
        %v1873 = vsel %vm832, %v1865, -inf
        %1874 = vmax.xlane.f32.xlu0 %v1873
        %v1875 = vpop.xlane.xlu0 %1874
        %v1876 = vsel %vm832, %v1870, -inf
        %1877 = vmax.xlane.f32.xlu0 %v1876
        %v1878 = vpop.xlane.xlu0 %1877
        %v1879 = vsub.f32 %v1865, %v1875
        %v1880 = vsub.f32 %v1870, %v1878
        %v1881 = vmul.f32 %v1879, 1.442695
        %v1882 = vpow.pop %v1881
        %v1883 = vmul.f32 %v1880, 1.442695
        %v1884 = vpow.pop %v1883
        %v1885 = vsel %vm832, %v1882, 0.0
        %1886 = vadd.xlane.f32.xlu0 %v1885
        %v1887 = vpop.xlane.xlu0 %1886
        %v1888 = vsel %vm832, %v1884, 0.0
        %1889 = vadd.xlane.f32.xlu0 %v1888
        %v1890 = vpop.xlane.xlu0 %1889
        %v1891 = vrcp.pop %v1887
        %v1892 = vrcp.pop %v1890
        %v1893 = vmul.f32 %v1882, %v1891
        %v1894 = vmul.f32 %v1884, %v1892
        %v1896 = vsel %vm832, %v1893, 0
        %v1899 = vsel %vm832, %v1894, 0
        %1901 = vmatprep.subr.mxu0 0.0
        %1902 = vmatpush1.msra.mxu0 %v1037
        %1903 = vmatprep.subr.mxu0 0.0
        %1904 = vmatpush1.msra.mxu0 %v1042
        %1905 = vmatprep.subr.mxu0 0.0
        %1906 = vmatpush1.msra.mxu0 0.0
        %1907 = vmatprep.subr.mxu0 0.0
        %1908 = vmatpush1.msra.mxu0 0.0
        %1909 = vmatprep.subr.mxu0 0.0
        %1910 = vmatpush1.msra.mxu0 0.0
        %1911 = vmatprep.subr.mxu0 0.0
        %1912 = vmatpush1.msra.mxu0 0.0
        %1913 = vmatprep.subr.mxu0 0.0
        %1914 = vmatpush1.msra.mxu0 0.0
        %1915 = vmatprep.subr.mxu0 0.0
        %1916 = vmatpush1.msra.mxu0 0.0
        %1917 = vmatprep.subr.mxu0 0.0
        %1918 = vmatpush1.msra.mxu0 0.0
        %1919 = vmatprep.subr.mxu0 0.0
        %1920 = vmatpush1.msra.mxu0 0.0
        %1921 = vmatprep.subr.mxu0 0.0
        %1922 = vmatpush1.msra.mxu0 0.0
        %1923 = vmatprep.subr.mxu0 0.0
        %1924 = vmatpush1.msra.mxu0 0.0
        %1925 = vmatprep.subr.mxu0 0.0
        %1926 = vmatpush1.msra.mxu0 0.0
        %1927 = vmatprep.subr.mxu0 0.0
        %1928 = vmatpush1.msra.mxu0 0.0
        %1929 = vmatprep.subr.mxu0 0.0
        %1930 = vmatpush1.msra.mxu0 0.0
        %1931 = vmatprep.subr.mxu0 0.0
        %1932 = vmatpush1.msra.mxu0 0.0
        %1933 = vmatprep.subr.mxu0 0.0
        %1934 = vmatpush1.msra.mxu0 0.0
        %1935 = vmatprep.subr.mxu0 0.0
        %1936 = vmatpush1.msra.mxu0 0.0
        %1937 = vmatprep.subr.mxu0 0.0
        %1938 = vmatpush1.msra.mxu0 0.0
        %1939 = vmatprep.subr.mxu0 0.0
        %1940 = vmatpush1.msra.mxu0 0.0
        %1941 = vmatprep.subr.mxu0 0.0
        %1942 = vmatpush1.msra.mxu0 0.0
        %1943 = vmatprep.subr.mxu0 0.0
        %1944 = vmatpush1.msra.mxu0 0.0
        %1945 = vmatprep.subr.mxu0 0.0
        %1946 = vmatpush1.msra.mxu0 0.0
        %1947 = vmatprep.subr.mxu0 0.0
        %1948 = vmatpush1.msra.mxu0 0.0
        %1949 = vmatprep.subr.mxu0 0.0
        %1950 = vmatpush1.msra.mxu0 0.0
        %1951 = vmatprep.subr.mxu0 0.0
        %1952 = vmatpush1.msra.mxu0 0.0
        %1953 = vmatprep.subr.mxu0 0.0
        %1954 = vmatpush1.msra.mxu0 0.0
        %1955 = vmatprep.subr.mxu0 0.0
        %1956 = vmatpush1.msra.mxu0 0.0
        %1957 = vmatprep.subr.mxu0 0.0
        %1958 = vmatpush1.msra.mxu0 0.0
        %1959 = vmatprep.subr.mxu0 0.0
        %1960 = vmatpush1.msra.mxu0 0.0
        %1961 = vmatprep.subr.mxu0 0.0
        %1962 = vmatpush1.msra.mxu0 0.0
        %1963 = vmatprep.subr.mxu0 0.0
        %1964 = vmatpush1.msra.mxu0 0.0
        %1965 = vmatprep.mubr.f32.mxu0 0.0
        %1966 = vmatmul.mubr.f32.gmra.mrb[0].mxu0 %v1896
        %v1967 = vpop.f32.mrb[0].mxu0
        %v1968 = vadd.f32 0.0, %v1967
        %v1969 = vpop.f32.mrb[0].mxu0
        %1970 = vmatprep.mubr.f32.mxu0 0.0
        %1971 = vmatmul.mubr.f32.gmra.mrb[0].mxu0 %v1899
        %v1972 = vpop.f32.mrb[0].mxu0
        %v1973 = vadd.f32 0.0, %v1972
        %v1974 = vpop.f32.mrb[0].mxu0
        %1975 = vdwg.mxu0
        %v1976 = vadd.f32 %v809, %v1968
        %v1977 = vadd.f32 %v810, %v1973
        %1978 = vst [vmem:[%s799] sm:$0xff] %v1976
        %1979 = vst [vmem:[%s799 + $0x8] sm:$0xff] %v1977
        %v1980 = vadd.f32 %v811, %v1968
        %v1981 = vadd.f32 %v812, %v1973
        %1982 = vst [vmem:[%s806] sm:$0xff] %v1980
        %1983 = vst [vmem:[%s806 + $0x8] sm:$0xff] %v1981
        %s1984 = sand.u32 %s380, 1
        %s1985 = scalar_lea.sflag [#allocation8], %s1984
        %s1986 = sand.u32 %s380, 1
        %s1987 = smul.addr %s1986, 16
        %s1988 = scalar_lea.vmem [#allocation11], %s1987
        %s1989 = sand.u32 %s37, 1
        %s1990 = scalar_lea.sflag [#allocation13], %s1989
        %s1991 = sand.u32 %s406, 1
        %s1992 = smul.addr %s1991, 16
        %s1993 = scalar_lea.vmem [#allocation12], %s1992
        %s1994 = sand.u32 %s37, 1
        %s1995 = scalar_lea.sflag [#allocation13], %s1994
        %s1996 = sand.u32 %s432, 1
        %s1997 = smul.addr %s1996, 16
        %s1998 = scalar_lea.vmem [#allocation14], %s1997
        // Predicated region
        $region241: #{tpu_custom_call.1} parent=215 // pred_check
          %p1999 = pneg %p390
        $region242: #{tpu_custom_call.1} parent=215 // pred_check_branch
          %2001 = sbr.rel (%p1999) target = $region244
        $region243: #{tpu_custom_call.1} parent=215 // pred_region
          %s2003 = ssub.s32 256, 256
          %2004 = vsyncadd %s1985, %s2003
          %s2005 = smul.addr %s37, 128
          %s2006 = scalar_lea.hbm %s15, %s2005
          %s2007 = sshll.u32 %s1988, 4
          %s2008 = int_to_ptr.vmem [resolvable:$true] %s2007
          %2013 = dma.vmem_to_hbm [thread:$0]  %s2008, 256, %s2006, %s1985, 128, 256, 8
        $region244: #{tpu_custom_call.1} parent=215 // pred_fallthru
          _
        // Predicated region
        $region245: #{tpu_custom_call.1} parent=215 // pred_check
          %p2014 = pneg %p416
        $region246: #{tpu_custom_call.1} parent=215 // pred_check_branch
          %2016 = sbr.rel (%p2014) target = $region248
        $region247: #{tpu_custom_call.1} parent=215 // pred_region
          %s2018 = ssub.s32 256, 256
          %2019 = vsyncadd %s1990, %s2018
          %s2020 = smul.addr %s37, 128
          %s2021 = scalar_lea.hbm %s16, %s2020
          %s2022 = sshll.u32 %s1993, 4
          %s2023 = int_to_ptr.vmem [resolvable:$true] %s2022
          %2028 = dma.vmem_to_hbm [thread:$0]  %s2023, 256, %s2021, %s1990, 128, 256, 8
        $region248: #{tpu_custom_call.1} parent=215 // pred_fallthru
          _
        // Predicated region
        $region249: #{tpu_custom_call.1} parent=215 // pred_check
          %p2029 = pneg %p442
        $region250: #{tpu_custom_call.1} parent=215 // pred_check_branch
          %2031 = sbr.rel (%p2029) target = $region252
        $region251: #{tpu_custom_call.1} parent=215 // pred_region
          %s2033 = ssub.s32 256, 256
          %2034 = vsyncadd %s1995, %s2033
          %s2035 = smul.addr %s37, 128
          %s2036 = scalar_lea.hbm %s17, %s2035
          %s2037 = sshll.u32 %s1998, 4
          %s2038 = int_to_ptr.vmem [resolvable:$true] %s2037
          %2043 = dma.vmem_to_hbm [thread:$0]  %s2038, 256, %s2036, %s1995, 128, 256, 8
        $region252: #{tpu_custom_call.1} parent=215 // pred_fallthru
          _
      $region216: #{tpu_custom_call.1} parent=5 // pred_fallthru
        _
      %p2044 = scmp.le.s32.totalorder 2, %s32
      // Predicated region
      $region253: #{tpu_custom_call.1} parent=5 // pred_check
        %p2045 = pneg %p2044
      $region254: #{tpu_custom_call.1} parent=5 // pred_check_branch
        %2047 = sbr.rel (%p2045) target = $region256
      $region255: #{tpu_custom_call.1} parent=5 // pred_region
        %s2048 = ssub.s32 %s32, 2
        // Predicated region
        $region257: #{tpu_custom_call.1} parent=255 // pred_check
          %p2049 = pneg %p396
        $region258: #{tpu_custom_call.1} parent=255 // pred_check_branch
          %2051 = sbr.rel (%p2049) target = $region260
        $region259: #{tpu_custom_call.1} parent=255 // pred_region
          %s2052 = sand.u32 %s381, 1
          %s2053 = scalar_lea.sflag [#allocation8], %s2052
          %s2054 = sand.u32 %s381, 1
          %s2055 = smul.addr %s2054, 16
          %s2056 = scalar_lea.vmem [#allocation11], %s2055
          %2057 = dma.done %s2053, 256
        $region260: #{tpu_custom_call.1} parent=255 // pred_fallthru
          _
        // Predicated region
        $region261: #{tpu_custom_call.1} parent=255 // pred_check
          %p2058 = pneg %p422
        $region262: #{tpu_custom_call.1} parent=255 // pred_check_branch
          %2060 = sbr.rel (%p2058) target = $region264
        $region263: #{tpu_custom_call.1} parent=255 // pred_region
          %s2061 = sand.u32 %s38, 1
          %s2062 = scalar_lea.sflag [#allocation13], %s2061
          %s2063 = sand.u32 %s407, 1
          %s2064 = smul.addr %s2063, 16
          %s2065 = scalar_lea.vmem [#allocation12], %s2064
          %2066 = dma.done %s2062, 256
        $region264: #{tpu_custom_call.1} parent=255 // pred_fallthru
          _
        // Predicated region
        $region265: #{tpu_custom_call.1} parent=255 // pred_check
          %p2067 = pneg %p448
        $region266: #{tpu_custom_call.1} parent=255 // pred_check_branch
          %2069 = sbr.rel (%p2067) target = $region268
        $region267: #{tpu_custom_call.1} parent=255 // pred_region
          %s2070 = sand.u32 %s38, 1
          %s2071 = scalar_lea.sflag [#allocation13], %s2070
          %s2072 = sand.u32 %s433, 1
          %s2073 = smul.addr %s2072, 16
          %s2074 = scalar_lea.vmem [#allocation14], %s2073
          %2075 = dma.done %s2071, 256
        $region268: #{tpu_custom_call.1} parent=255 // pred_fallthru
          _
      $region256: #{tpu_custom_call.1} parent=5 // pred_fallthru
        _
    $region6: #{tpu_custom_call.1} parent=1 // loop_footer
      %s36 = sadd.s32 1, %s32
    $region7: #{tpu_custom_call.1} parent=1 // loop_footer_branch
      %31 = sbr.rel target = $region3
    $region8: #{tpu_custom_call.1} parent=1 // loop_exit
      _
    %2076 = vsyncpa [#allocation7], 1
    %s2077 = scalar_lea.sflag [#allocation7], 1
    %2078 = vsyncpa %s2077, 1
    %2079 = vsyncpa [#allocation10], 1
    %2080 = vsyncpa [#allocation8], 1
    %s2081 = scalar_lea.sflag [#allocation8], 1
    %2082 = vsyncpa %s2081, 1
    %2083 = vsyncpa [#allocation13], 1
    %s2084 = scalar_lea.sflag [#allocation13], 1
    %2085 = vsyncpa %s2084, 1

</llo_original>
